<compile_context>
chip_gen: v7x
topology: tpu7x:2x2x1
jax: 0.10.0
libtpu: 0.0.40
codegen_flags: <defaults>
</compile_context>

<pallas_src>
import jax
import jax.numpy as jnp
from jax import lax
from jax.experimental import pallas as pl
from jax.experimental.pallas import tpu as pltpu

# ---- hyperparameters (torch file uses module-level globals; small picks) ----
VOCAB_SIZE = 50
BLOCK_SIZE = 8            # sequence length T (pos_emb forces T == block_size)
N_EMBD = 32
N_HEAD = 4
N_LAYER = 2
FEED_FORWARD = 64
HEAD_SIZE = N_EMBD // N_HEAD
LN_EPS = 1e-5             # torch nn.LayerNorm default


def _layer_norm(x, gamma, beta):
    mu = jnp.mean(x, axis=-1, keepdims=True)
    var = jnp.mean(jnp.square(x - mu), axis=-1, keepdims=True)
    return (x - mu) * lax.rsqrt(var + LN_EPS) * gamma + beta


def encoder_kernel(tok_ref, pos_ref,
                   g1_ref, be1_ref, wqkv_ref, wp_ref, bp_ref,
                   g2_ref, be2_ref, w1_ref, bf1_ref, w2_ref, bf2_ref,
                   pooled_ref, attn_ref,
                   x_scr):
    """One grid step = (batch element b, layer l).

    tok_ref/pos_ref: (1, T, C)      token / positional embeddings
    *_ref weights:   (1, ...)       layer-l slice of the stacked weights
    pooled_ref:      (1, 1, C)      written only at the last layer
    attn_ref:        (1, 1, H, T, T) softmax attention maps for this (l, b)
    x_scr:           (T, C) VMEM    residual stream, resident across layers
    """
    l = pl.program_id(1)
    T, C, H, D = BLOCK_SIZE, N_EMBD, N_HEAD, HEAD_SIZE

    # ----- layer 0: initialize the VMEM-resident residual stream -----
    @pl.when(l == 0)
    def _init():
        x_scr[...] = tok_ref[0] + pos_ref[0]

    x = x_scr[...]                                                   # (T, C)

    # ----- multi-head self-attention on ln1(x), all heads batched -----
    xn = _layer_norm(x, g1_ref[0], be1_ref[0])
    qkv = jnp.dot(xn, wqkv_ref[0], preferred_element_type=jnp.float32)  # (T, 3C)
    q = qkv[:, 0 * C:1 * C].reshape(T, H, D).swapaxes(0, 1)             # (H, T, D)
    k = qkv[:, 1 * C:2 * C].reshape(T, H, D).swapaxes(0, 1)
    v = qkv[:, 2 * C:3 * C].reshape(T, H, D).swapaxes(0, 1)

    wei = jnp.einsum('htd,hsd->hts', q, k,
                     preferred_element_type=jnp.float32) * (D ** -0.5)  # (H, T, T)
    wei = wei - jnp.max(wei, axis=-1, keepdims=True)                 # stable softmax
    wei = jnp.exp(wei)
    wei = wei / jnp.sum(wei, axis=-1, keepdims=True)
    attn_ref[0, 0] = wei                                             # one store/step

    out = jnp.einsum('hts,hsd->htd', wei, v,
                     preferred_element_type=jnp.float32)             # (H, T, D)
    sa = out.swapaxes(0, 1).reshape(T, C)                            # (T, C)
    sa = jnp.dot(sa, wp_ref[0], preferred_element_type=jnp.float32) + bp_ref[0]
    x = x + sa

    # ----- feed-forward on ln2(x) -----
    xn2 = _layer_norm(x, g2_ref[0], be2_ref[0])
    h1 = jnp.maximum(
        jnp.dot(xn2, w1_ref[0], preferred_element_type=jnp.float32) + bf1_ref[0],
        0.0)
    ff = jnp.dot(h1, w2_ref[0], preferred_element_type=jnp.float32) + bf2_ref[0]
    x = x + ff

    x_scr[...] = x                                                   # stays in VMEM

    # ----- last layer: fused mean-pool over the sequence axis -----
    @pl.when(l == pl.num_programs(1) - 1)
    def _finalize():
        pooled_ref[0] = jnp.mean(x, axis=0, keepdims=True)           # (1, C)


WEIGHT_NAMES = ("ln1_g", "ln1_b", "wqkv", "wproj", "bproj",
                "ln2_g", "ln2_b", "w1", "b1", "w2", "b2")


def encoder_forward(params, idx):
    """idx: (B, T=block_size) int32 token ids.

    Returns (pooled (B, n_embd), attention_maps (N_LAYER*N_HEAD, B, T, T)),
    stacked in the same order as the PyTorch list
    (layer 0 head 0..H-1, layer 1 head 0..H-1, ...).
    """
    B, T = idx.shape
    C, H = N_EMBD, N_HEAD

    tok_emb = jnp.take(params["tok_emb"], idx, axis=0)       # (B, T, C)  XLA gather
    pos_emb = params["pos_emb"][None]                        # (1, T, C)

    weights = [params[name] for name in WEIGHT_NAMES]        # each (N_LAYER, ...)

    def wspec(arr):
        nz = arr.ndim - 1
        return pl.BlockSpec((1,) + arr.shape[1:],
                            lambda b, l, _n=nz: (l,) + (0,) * _n)

    in_specs = ([pl.BlockSpec((1, T, C), lambda b, l: (b, 0, 0)),
                 pl.BlockSpec((1, T, C), lambda b, l: (0, 0, 0))]
                + [wspec(w) for w in weights])
    out_specs = (
        # pooled: constant block index along the arbitrary (layer) axis ->
        # stays resident in VMEM, written only at the last layer.
        pl.BlockSpec((1, 1, C), lambda b, l: (b, 0, 0)),
        pl.BlockSpec((1, 1, H, T, T), lambda b, l: (l, b, 0, 0, 0)),
    )
    out_shapes = (jax.ShapeDtypeStruct((B, 1, C), jnp.float32),
                  jax.ShapeDtypeStruct((N_LAYER, B, H, T, T), jnp.float32))

    pooled, attn = pl.pallas_call(
        encoder_kernel,
        out_shape=out_shapes,
        grid=(B, N_LAYER),
        in_specs=in_specs,
        out_specs=out_specs,
        scratch_shapes=[pltpu.VMEM((T, C), jnp.float32)],
        compiler_params=pltpu.CompilerParams(
            dimension_semantics=("parallel", "arbitrary")),
    )(tok_emb, pos_emb, *weights)

    pooled = pooled[:, 0, :]                                  # (B, C)
    # (L, B, H, T, T) -> (L*H, B, T, T), torch list ordering (layer-major).
    attention_maps = jnp.transpose(attn, (0, 2, 1, 3, 4)).reshape(
        N_LAYER * N_HEAD, B, T, T)
    return pooled, attention_maps


# ----------------------------- parameter init -----------------------------
def init_params(key):
    def nrm(k, shape, scale=0.02):
        return scale * jax.random.normal(k, shape, dtype=jnp.float32)

    keys = jax.random.split(key, 2 + N_LAYER)
    params = {
        "tok_emb": nrm(keys[0], (VOCAB_SIZE, N_EMBD)),
        "pos_emb": nrm(keys[1], (BLOCK_SIZE, N_EMBD)),
    }

    stacks = {name: [] for name in WEIGHT_NAMES}
    for l in range(N_LAYER):
        ks = jax.random.split(keys[2 + l], 8)
        stacks["ln1_g"].append(jnp.ones((1, N_EMBD), jnp.float32))
        stacks["ln1_b"].append(jnp.zeros((1, N_EMBD), jnp.float32))
        # fused [Wq | Wk | Wv] -> (C, 3C); column blocks are head-major within.
        stacks["wqkv"].append(jnp.concatenate(
            [nrm(ks[0], (N_EMBD, N_EMBD)),
             nrm(ks[1], (N_EMBD, N_EMBD)),
             nrm(ks[2], (N_EMBD, N_EMBD))], axis=1))
        stacks["wproj"].append(nrm(ks[3], (N_EMBD, N_EMBD)))
        stacks["bproj"].append(jnp.zeros((1, N_EMBD), jnp.float32))
        stacks["ln2_g"].append(jnp.ones((1, N_EMBD), jnp.float32))
        stacks["ln2_b"].append(jnp.zeros((1, N_EMBD), jnp.float32))
        stacks["w1"].append(nrm(ks[4], (N_EMBD, FEED_FORWARD)))
        stacks["b1"].append(nrm(ks[5], (1, FEED_FORWARD)))
        stacks["w2"].append(nrm(ks[6], (FEED_FORWARD, N_EMBD)))
        stacks["b2"].append(nrm(ks[7], (1, N_EMBD)))

    for name in WEIGHT_NAMES:
        params[name] = jnp.stack(stacks[name])                # (N_LAYER, ...)
    return params


if __name__ == "__main__":
    key = jax.random.PRNGKey(0)
    pkey, ikey = jax.random.split(key)

    params = init_params(pkey)

    B = 2
    idx = jax.random.randint(ikey, (B, BLOCK_SIZE), 0, VOCAB_SIZE, dtype=jnp.int32)

    fwd = jax.jit(encoder_forward)
    pooled, attention_maps = fwd(params, idx)
    jax.block_until_ready(pooled)
    jax.block_until_ready(attention_maps)

    assert pooled.shape == (B, N_EMBD)
    assert attention_maps.shape == (N_LAYER * N_HEAD, B, BLOCK_SIZE, BLOCK_SIZE)
    # softmax rows must sum to 1
    assert bool(jnp.allclose(jnp.sum(attention_maps, axis=-1), 1.0, atol=1e-5))
    assert bool(jnp.all(jnp.isfinite(pooled)))

    print("KERNEL_OK")
</pallas_src>

<mosaic_0001>
module attributes {stable_mosaic.version = 11 : i64} {
  func.func @encoder_kernel(%arg0: i32, %arg1: i32, %arg2: memref<1x8x32xf32, #tpu.memory_space<vmem>>, %arg3: memref<1x8x32xf32, #tpu.memory_space<vmem>>, %arg4: memref<1x1x32xf32, #tpu.memory_space<vmem>>, %arg5: memref<1x1x32xf32, #tpu.memory_space<vmem>>, %arg6: memref<1x32x96xf32, #tpu.memory_space<vmem>>, %arg7: memref<1x32x32xf32, #tpu.memory_space<vmem>>, %arg8: memref<1x1x32xf32, #tpu.memory_space<vmem>>, %arg9: memref<1x1x32xf32, #tpu.memory_space<vmem>>, %arg10: memref<1x1x32xf32, #tpu.memory_space<vmem>>, %arg11: memref<1x32x64xf32, #tpu.memory_space<vmem>>, %arg12: memref<1x1x64xf32, #tpu.memory_space<vmem>>, %arg13: memref<1x64x32xf32, #tpu.memory_space<vmem>>, %arg14: memref<1x1x32xf32, #tpu.memory_space<vmem>>, %arg15: memref<1x1x32xf32, #tpu.memory_space<vmem>>, %arg16: memref<1x1x4x8x8xf32, #tpu.memory_space<vmem>>, %arg17: memref<8x32xf32, #tpu.memory_space<vmem>>) attributes {dimension_semantics = [#tpu.dimension_semantics<parallel>, #tpu.dimension_semantics<arbitrary>], iteration_bounds = array<i64: 2, 2>, scalar_prefetch = 0 : i64, scratch_operands = 1 : i64, tpu.core_type = #tpu.core_type<tc>, window_params = [{transform_indices = @transform_0, window_bounds = array<i64: 1, 8, 32>}, {pipeline_mode = #tpu.pipeline_mode<synchronous>, transform_indices = @transform_1, window_bounds = array<i64: 1, 8, 32>}, {transform_indices = @transform_2, window_bounds = array<i64: 1, 1, 32>}, {transform_indices = @transform_3, window_bounds = array<i64: 1, 1, 32>}, {transform_indices = @transform_4, window_bounds = array<i64: 1, 32, 96>}, {transform_indices = @transform_5, window_bounds = array<i64: 1, 32, 32>}, {transform_indices = @transform_6, window_bounds = array<i64: 1, 1, 32>}, {transform_indices = @transform_7, window_bounds = array<i64: 1, 1, 32>}, {transform_indices = @transform_8, window_bounds = array<i64: 1, 1, 32>}, {transform_indices = @transform_9, window_bounds = array<i64: 1, 32, 64>}, {transform_indices = @transform_10, window_bounds = array<i64: 1, 1, 64>}, {transform_indices = @transform_11, window_bounds = array<i64: 1, 64, 32>}, {transform_indices = @transform_12, window_bounds = array<i64: 1, 1, 32>}, {transform_indices = @transform_13, window_bounds = array<i64: 1, 1, 32>}, {transform_indices = @transform_14, window_bounds = array<i64: 1, 1, 4, 8, 8>}]} {
    %c0_i32 = arith.constant 0 : i32
    %0 = arith.cmpi eq, %arg1, %c0_i32 : i32
    %1 = arith.extui %0 : i1 to i32
    %c0_i32_0 = arith.constant 0 : i32
    %2 = arith.cmpi ne, %1, %c0_i32_0 : i32
    scf.if %2 {
      %c0_62 = arith.constant 0 : index
      %c0_63 = arith.constant 0 : index
      %c0_64 = arith.constant 0 : index
      %115 = vector.load %arg2[%c0_62, %c0_63, %c0_64] : memref<1x8x32xf32, #tpu.memory_space<vmem>>, vector<1x8x32xf32>
      %116 = vector.shape_cast %115 : vector<1x8x32xf32> to vector<8x32xf32>
      %c0_65 = arith.constant 0 : index
      %c0_66 = arith.constant 0 : index
      %c0_67 = arith.constant 0 : index
      %117 = vector.load %arg3[%c0_65, %c0_66, %c0_67] : memref<1x8x32xf32, #tpu.memory_space<vmem>>, vector<1x8x32xf32>
      %118 = vector.shape_cast %117 : vector<1x8x32xf32> to vector<8x32xf32>
      %119 = arith.addf %116, %118 : vector<8x32xf32>
      %c0_68 = arith.constant 0 : index
      %c0_69 = arith.constant 0 : index
      %120 = vector.load %arg17[%c0_68, %c0_69] : memref<8x32xf32, #tpu.memory_space<vmem>>, vector<8x32xf32>
      tpu.vector_store %arg17[%c0_68, %c0_69], %119 {strides = array<i32>} : memref<8x32xf32, #tpu.memory_space<vmem>>, vector<8x32xf32>,
    } else {
    }
    %c0 = arith.constant 0 : index
    %c0_1 = arith.constant 0 : index
    %3 = vector.load %arg17[%c0, %c0_1] : memref<8x32xf32, #tpu.memory_space<vmem>>, vector<8x32xf32>
    %c0_2 = arith.constant 0 : index
    %c0_3 = arith.constant 0 : index
    %c0_4 = arith.constant 0 : index
    %4 = vector.load %arg4[%c0_2, %c0_3, %c0_4] : memref<1x1x32xf32, #tpu.memory_space<vmem>>, vector<1x1x32xf32>
    %5 = vector.shape_cast %4 : vector<1x1x32xf32> to vector<1x32xf32>
    %c0_5 = arith.constant 0 : index
    %c0_6 = arith.constant 0 : index
    %c0_7 = arith.constant 0 : index
    %6 = vector.load %arg5[%c0_5, %c0_6, %c0_7] : memref<1x1x32xf32, #tpu.memory_space<vmem>>, vector<1x1x32xf32>
    %7 = vector.shape_cast %6 : vector<1x1x32xf32> to vector<1x32xf32>
    %cst = arith.constant dense<0.000000e+00> : vector<8xf32>
    %8 = vector.multi_reduction <add>, %3, %cst [1] : vector<8x32xf32> to vector<8xf32>
    %9 = vector.shape_cast %8 : vector<8xf32> to vector<8x1xf32>
    %cst_8 = arith.constant 3.200000e+01 : f32
    %10 = vector.broadcast %cst_8 : f32 to vector<8x1xf32>
    %11 = arith.divf %9, %10 : vector<8x1xf32>
    %12 = vector.broadcast %11 : vector<8x1xf32> to vector<8x32xf32>
    %13 = arith.subf %3, %12 : vector<8x32xf32>
    %14 = arith.mulf %13, %13 : vector<8x32xf32>
    %cst_9 = arith.constant dense<0.000000e+00> : vector<8xf32>
    %15 = vector.multi_reduction <add>, %14, %cst_9 [1] : vector<8x32xf32> to vector<8xf32>
    %16 = vector.shape_cast %15 : vector<8xf32> to vector<8x1xf32>
    %cst_10 = arith.constant 3.200000e+01 : f32
    %17 = vector.broadcast %cst_10 : f32 to vector<8x1xf32>
    %18 = arith.divf %16, %17 : vector<8x1xf32>
    %19 = vector.broadcast %11 : vector<8x1xf32> to vector<8x32xf32>
    %20 = arith.subf %3, %19 : vector<8x32xf32>
    %cst_11 = arith.constant 9.99999974E-6 : f32
    %21 = vector.broadcast %cst_11 : f32 to vector<8x1xf32>
    %22 = arith.addf %18, %21 : vector<8x1xf32>
    %23 = math.rsqrt %22 : vector<8x1xf32>
    %24 = vector.broadcast %23 : vector<8x1xf32> to vector<8x32xf32>
    %25 = arith.mulf %20, %24 : vector<8x32xf32>
    %26 = vector.broadcast %5 : vector<1x32xf32> to vector<8x32xf32>
    %27 = arith.mulf %25, %26 : vector<8x32xf32>
    %28 = vector.broadcast %7 : vector<1x32xf32> to vector<8x32xf32>
    %29 = arith.addf %27, %28 : vector<8x32xf32>
    %c0_12 = arith.constant 0 : index
    %c0_13 = arith.constant 0 : index
    %c0_14 = arith.constant 0 : index
    %30 = vector.load %arg6[%c0_12, %c0_13, %c0_14] : memref<1x32x96xf32, #tpu.memory_space<vmem>>, vector<1x32x96xf32>
    %31 = vector.shape_cast %30 : vector<1x32x96xf32> to vector<32x96xf32>
    %cst_15 = arith.constant dense<0.000000e+00> : vector<8x96xf32>
    %32 = tpu.matmul %29, %31, %cst_15 {dimension_numbers = #tpu.dot_dimension_numbers<[1], [0], [0], [1], [0, 0, 1, 1], [], []>} : vector<8x32xf32>, vector<32x96xf32>, vector<8x96xf32> -> vector<8x96xf32>
    %33 = vector.extract_strided_slice %32 {offsets = [0, 0], sizes = [8, 32], strides = [1, 1]} : vector<8x96xf32> to vector<8x32xf32>
    %34 = vector.shape_cast %33 : vector<8x32xf32> to vector<8x4x8xf32>
    %35 = tpu.transpose %34, [1, 0, 2] : vector<8x4x8xf32> -> vector<4x8x8xf32>
    %36 = vector.extract_strided_slice %32 {offsets = [0, 32], sizes = [8, 32], strides = [1, 1]} : vector<8x96xf32> to vector<8x32xf32>
    %37 = vector.shape_cast %36 : vector<8x32xf32> to vector<8x4x8xf32>
    %38 = tpu.transpose %37, [1, 0, 2] : vector<8x4x8xf32> -> vector<4x8x8xf32>
    %39 = vector.extract_strided_slice %32 {offsets = [0, 64], sizes = [8, 32], strides = [1, 1]} : vector<8x96xf32> to vector<8x32xf32>
    %40 = vector.shape_cast %39 : vector<8x32xf32> to vector<8x4x8xf32>
    %41 = tpu.transpose %40, [1, 0, 2] : vector<8x4x8xf32> -> vector<4x8x8xf32>
    "tpu.trace_start"() <{level = 10 : i32, message = "htd,hsd->hts"}> : () -> ()
    %cst_16 = arith.constant dense<0.000000e+00> : vector<4x8x8xf32>
    %42 = tpu.matmul %35, %38, %cst_16 {dimension_numbers = #tpu.dot_dimension_numbers<[2], [2], [1], [1], [0, 0, 0, 1, 1, 1], [0], [0]>} : vector<4x8x8xf32>, vector<4x8x8xf32>, vector<4x8x8xf32> -> vector<4x8x8xf32>
    "tpu.trace_stop"() : () -> ()
    %cst_17 = arith.constant 0.353553385 : f32
    %43 = vector.broadcast %cst_17 : f32 to vector<4x8x8xf32>
    %44 = arith.mulf %42, %43 : vector<4x8x8xf32>
    %cst_18 = arith.constant dense<0xFF800000> : vector<4x8xf32>
    %45 = vector.multi_reduction <maximumf>, %44, %cst_18 [2] : vector<4x8x8xf32> to vector<4x8xf32>
    %46 = vector.shape_cast %45 : vector<4x8xf32> to vector<4x8x1xf32>
    %47 = vector.broadcast %46 : vector<4x8x1xf32> to vector<4x8x8xf32>
    %48 = arith.subf %44, %47 : vector<4x8x8xf32>
    %49 = math.exp %48 : vector<4x8x8xf32>
    %cst_19 = arith.constant dense<0.000000e+00> : vector<4x8xf32>
    %50 = vector.multi_reduction <add>, %49, %cst_19 [2] : vector<4x8x8xf32> to vector<4x8xf32>
    %51 = vector.shape_cast %50 : vector<4x8xf32> to vector<4x8x1xf32>
    %52 = vector.broadcast %51 : vector<4x8x1xf32> to vector<4x8x8xf32>
    %53 = arith.divf %49, %52 : vector<4x8x8xf32>
    %c0_20 = arith.constant 0 : index
    %c0_21 = arith.constant 0 : index
    %c0_22 = arith.constant 0 : index
    %c0_23 = arith.constant 0 : index
    %c0_24 = arith.constant 0 : index
    %54 = vector.load %arg16[%c0_20, %c0_21, %c0_22, %c0_23, %c0_24] : memref<1x1x4x8x8xf32, #tpu.memory_space<vmem>>, vector<1x1x4x8x8xf32>
    %55 = vector.shape_cast %54 : vector<1x1x4x8x8xf32> to vector<4x8x8xf32>
    %56 = vector.shape_cast %53 : vector<4x8x8xf32> to vector<1x1x4x8x8xf32>
    tpu.vector_store %arg16[%c0_20, %c0_21, %c0_22, %c0_23, %c0_24], %56 {strides = array<i32>} : memref<1x1x4x8x8xf32, #tpu.memory_space<vmem>>, vector<1x1x4x8x8xf32>,
    "tpu.trace_start"() <{level = 10 : i32, message = "hts,hsd->htd"}> : () -> ()
    %cst_25 = arith.constant dense<0.000000e+00> : vector<4x8x8xf32>
    %57 = tpu.matmul %53, %41, %cst_25 {dimension_numbers = #tpu.dot_dimension_numbers<[2], [1], [1], [2], [0, 0, 0, 1, 1, 2], [0], [0]>} : vector<4x8x8xf32>, vector<4x8x8xf32>, vector<4x8x8xf32> -> vector<4x8x8xf32>
    "tpu.trace_stop"() : () -> ()
    %58 = tpu.transpose %57, [1, 0, 2] : vector<4x8x8xf32> -> vector<8x4x8xf32>
    %59 = vector.shape_cast %58 : vector<8x4x8xf32> to vector<8x32xf32>
    %c0_26 = arith.constant 0 : index
    %c0_27 = arith.constant 0 : index
    %c0_28 = arith.constant 0 : index
    %60 = vector.load %arg7[%c0_26, %c0_27, %c0_28] : memref<1x32x32xf32, #tpu.memory_space<vmem>>, vector<1x32x32xf32>
    %61 = vector.shape_cast %60 : vector<1x32x32xf32> to vector<32x32xf32>
    %cst_29 = arith.constant dense<0.000000e+00> : vector<8x32xf32>
    %62 = tpu.matmul %59, %61, %cst_29 {dimension_numbers = #tpu.dot_dimension_numbers<[1], [0], [0], [1], [0, 0, 1, 1], [], []>} : vector<8x32xf32>, vector<32x32xf32>, vector<8x32xf32> -> vector<8x32xf32>
    %c0_30 = arith.constant 0 : index
    %c0_31 = arith.constant 0 : index
    %c0_32 = arith.constant 0 : index
    %63 = vector.load %arg8[%c0_30, %c0_31, %c0_32] : memref<1x1x32xf32, #tpu.memory_space<vmem>>, vector<1x1x32xf32>
    %64 = vector.shape_cast %63 : vector<1x1x32xf32> to vector<1x32xf32>
    %65 = vector.broadcast %64 : vector<1x32xf32> to vector<8x32xf32>
    %66 = arith.addf %62, %65 : vector<8x32xf32>
    %67 = arith.addf %3, %66 : vector<8x32xf32>
    %c0_33 = arith.constant 0 : index
    %c0_34 = arith.constant 0 : index
    %c0_35 = arith.constant 0 : index
    %68 = vector.load %arg9[%c0_33, %c0_34, %c0_35] : memref<1x1x32xf32, #tpu.memory_space<vmem>>, vector<1x1x32xf32>
    %69 = vector.shape_cast %68 : vector<1x1x32xf32> to vector<1x32xf32>
    %c0_36 = arith.constant 0 : index
    %c0_37 = arith.constant 0 : index
    %c0_38 = arith.constant 0 : index
    %70 = vector.load %arg10[%c0_36, %c0_37, %c0_38] : memref<1x1x32xf32, #tpu.memory_space<vmem>>, vector<1x1x32xf32>
    %71 = vector.shape_cast %70 : vector<1x1x32xf32> to vector<1x32xf32>
    %cst_39 = arith.constant dense<0.000000e+00> : vector<8xf32>
    %72 = vector.multi_reduction <add>, %67, %cst_39 [1] : vector<8x32xf32> to vector<8xf32>
    %73 = vector.shape_cast %72 : vector<8xf32> to vector<8x1xf32>
    %cst_40 = arith.constant 3.200000e+01 : f32
    %74 = vector.broadcast %cst_40 : f32 to vector<8x1xf32>
    %75 = arith.divf %73, %74 : vector<8x1xf32>
    %76 = vector.broadcast %75 : vector<8x1xf32> to vector<8x32xf32>
    %77 = arith.subf %67, %76 : vector<8x32xf32>
    %78 = arith.mulf %77, %77 : vector<8x32xf32>
    %cst_41 = arith.constant dense<0.000000e+00> : vector<8xf32>
    %79 = vector.multi_reduction <add>, %78, %cst_41 [1] : vector<8x32xf32> to vector<8xf32>
    %80 = vector.shape_cast %79 : vector<8xf32> to vector<8x1xf32>
    %cst_42 = arith.constant 3.200000e+01 : f32
    %81 = vector.broadcast %cst_42 : f32 to vector<8x1xf32>
    %82 = arith.divf %80, %81 : vector<8x1xf32>
    %83 = vector.broadcast %75 : vector<8x1xf32> to vector<8x32xf32>
    %84 = arith.subf %67, %83 : vector<8x32xf32>
    %cst_43 = arith.constant 9.99999974E-6 : f32
    %85 = vector.broadcast %cst_43 : f32 to vector<8x1xf32>
    %86 = arith.addf %82, %85 : vector<8x1xf32>
    %87 = math.rsqrt %86 : vector<8x1xf32>
    %88 = vector.broadcast %87 : vector<8x1xf32> to vector<8x32xf32>
    %89 = arith.mulf %84, %88 : vector<8x32xf32>
    %90 = vector.broadcast %69 : vector<1x32xf32> to vector<8x32xf32>
    %91 = arith.mulf %89, %90 : vector<8x32xf32>
    %92 = vector.broadcast %71 : vector<1x32xf32> to vector<8x32xf32>
    %93 = arith.addf %91, %92 : vector<8x32xf32>
    %c0_44 = arith.constant 0 : index
    %c0_45 = arith.constant 0 : index
    %c0_46 = arith.constant 0 : index
    %94 = vector.load %arg11[%c0_44, %c0_45, %c0_46] : memref<1x32x64xf32, #tpu.memory_space<vmem>>, vector<1x32x64xf32>
    %95 = vector.shape_cast %94 : vector<1x32x64xf32> to vector<32x64xf32>
    %cst_47 = arith.constant dense<0.000000e+00> : vector<8x64xf32>
    %96 = tpu.matmul %93, %95, %cst_47 {dimension_numbers = #tpu.dot_dimension_numbers<[1], [0], [0], [1], [0, 0, 1, 1], [], []>} : vector<8x32xf32>, vector<32x64xf32>, vector<8x64xf32> -> vector<8x64xf32>
    %c0_48 = arith.constant 0 : index
    %c0_49 = arith.constant 0 : index
    %c0_50 = arith.constant 0 : index
    %97 = vector.load %arg12[%c0_48, %c0_49, %c0_50] : memref<1x1x64xf32, #tpu.memory_space<vmem>>, vector<1x1x64xf32>
    %98 = vector.shape_cast %97 : vector<1x1x64xf32> to vector<1x64xf32>
    %99 = vector.broadcast %98 : vector<1x64xf32> to vector<8x64xf32>
    %100 = arith.addf %96, %99 : vector<8x64xf32>
    %cst_51 = arith.constant 0.000000e+00 : f32
    %101 = vector.broadcast %cst_51 : f32 to vector<8x64xf32>
    %102 = arith.maximumf %100, %101 : vector<8x64xf32>
    %c0_52 = arith.constant 0 : index
    %c0_53 = arith.constant 0 : index
    %c0_54 = arith.constant 0 : index
    %103 = vector.load %arg13[%c0_52, %c0_53, %c0_54] : memref<1x64x32xf32, #tpu.memory_space<vmem>>, vector<1x64x32xf32>
    %104 = vector.shape_cast %103 : vector<1x64x32xf32> to vector<64x32xf32>
    %cst_55 = arith.constant dense<0.000000e+00> : vector<8x32xf32>
    %105 = tpu.matmul %102, %104, %cst_55 {dimension_numbers = #tpu.dot_dimension_numbers<[1], [0], [0], [1], [0, 0, 1, 1], [], []>} : vector<8x64xf32>, vector<64x32xf32>, vector<8x32xf32> -> vector<8x32xf32>
    %c0_56 = arith.constant 0 : index
    %c0_57 = arith.constant 0 : index
    %c0_58 = arith.constant 0 : index
    %106 = vector.load %arg14[%c0_56, %c0_57, %c0_58] : memref<1x1x32xf32, #tpu.memory_space<vmem>>, vector<1x1x32xf32>
    %107 = vector.shape_cast %106 : vector<1x1x32xf32> to vector<1x32xf32>
    %108 = vector.broadcast %107 : vector<1x32xf32> to vector<8x32xf32>
    %109 = arith.addf %105, %108 : vector<8x32xf32>
    %110 = arith.addf %67, %109 : vector<8x32xf32>
    %c0_59 = arith.constant 0 : index
    %c0_60 = arith.constant 0 : index
    %111 = vector.load %arg17[%c0_59, %c0_60] : memref<8x32xf32, #tpu.memory_space<vmem>>, vector<8x32xf32>
    tpu.vector_store %arg17[%c0_59, %c0_60], %110 {strides = array<i32>} : memref<8x32xf32, #tpu.memory_space<vmem>>, vector<8x32xf32>,
    %c1_i32 = arith.constant 1 : i32
    %112 = arith.cmpi eq, %arg1, %c1_i32 : i32
    %113 = arith.extui %112 : i1 to i32
    %c0_i32_61 = arith.constant 0 : i32
    %114 = arith.cmpi ne, %113, %c0_i32_61 : i32
    scf.if %114 {
      %cst_62 = arith.constant dense<0.000000e+00> : vector<32xf32>
      %115 = vector.multi_reduction <add>, %110, %cst_62 [0] : vector<8x32xf32> to vector<32xf32>
      %116 = vector.shape_cast %115 : vector<32xf32> to vector<1x32xf32>
      %cst_63 = arith.constant 8.000000e+00 : f32
      %117 = vector.broadcast %cst_63 : f32 to vector<1x32xf32>
      %118 = arith.divf %116, %117 : vector<1x32xf32>
      %c0_64 = arith.constant 0 : index
      %c0_65 = arith.constant 0 : index
      %c0_66 = arith.constant 0 : index
      %119 = vector.load %arg15[%c0_64, %c0_65, %c0_66] : memref<1x1x32xf32, #tpu.memory_space<vmem>>, vector<1x1x32xf32>
      %120 = vector.shape_cast %119 : vector<1x1x32xf32> to vector<1x32xf32>
      %121 = vector.shape_cast %118 : vector<1x32xf32> to vector<1x1x32xf32>
      tpu.vector_store %arg15[%c0_64, %c0_65, %c0_66], %121 {strides = array<i32>} : memref<1x1x32xf32, #tpu.memory_space<vmem>>, vector<1x1x32xf32>,
    } else {
    }
    return
  }
  func.func @transform_0(%arg0: i32, %arg1: i32) -> (i32, i32, i32) {
    %c0_i32 = arith.constant 0 : i32
    %c0_i32_0 = arith.constant 0 : i32
    %c0_i32_1 = arith.constant 0 : i32
    return %arg0, %c0_i32, %c0_i32_0 : i32, i32, i32
  }
  func.func @transform_1(%arg0: i32, %arg1: i32) -> (i32, i32, i32) {
    %c0_i32 = arith.constant 0 : i32
    %c0_i32_0 = arith.constant 0 : i32
    %c0_i32_1 = arith.constant 0 : i32
    %c0_i32_2 = arith.constant 0 : i32
    return %c0_i32, %c0_i32_0, %c0_i32_1 : i32, i32, i32
  }
  func.func @transform_2(%arg0: i32, %arg1: i32) -> (i32, i32, i32) {
    %c0_i32 = arith.constant 0 : i32
    %c0_i32_0 = arith.constant 0 : i32
    %c0_i32_1 = arith.constant 0 : i32
    return %arg1, %c0_i32, %c0_i32_0 : i32, i32, i32
  }
  func.func @transform_3(%arg0: i32, %arg1: i32) -> (i32, i32, i32) {
    %c0_i32 = arith.constant 0 : i32
    %c0_i32_0 = arith.constant 0 : i32
    %c0_i32_1 = arith.constant 0 : i32
    return %arg1, %c0_i32, %c0_i32_0 : i32, i32, i32
  }
  func.func @transform_4(%arg0: i32, %arg1: i32) -> (i32, i32, i32) {
    %c0_i32 = arith.constant 0 : i32
    %c0_i32_0 = arith.constant 0 : i32
    %c0_i32_1 = arith.constant 0 : i32
    return %arg1, %c0_i32, %c0_i32_0 : i32, i32, i32
  }
  func.func @transform_5(%arg0: i32, %arg1: i32) -> (i32, i32, i32) {
    %c0_i32 = arith.constant 0 : i32
    %c0_i32_0 = arith.constant 0 : i32
    %c0_i32_1 = arith.constant 0 : i32
    return %arg1, %c0_i32, %c0_i32_0 : i32, i32, i32
  }
  func.func @transform_6(%arg0: i32, %arg1: i32) -> (i32, i32, i32) {
    %c0_i32 = arith.constant 0 : i32
    %c0_i32_0 = arith.constant 0 : i32
    %c0_i32_1 = arith.constant 0 : i32
    return %arg1, %c0_i32, %c0_i32_0 : i32, i32, i32
  }
  func.func @transform_7(%arg0: i32, %arg1: i32) -> (i32, i32, i32) {
    %c0_i32 = arith.constant 0 : i32
    %c0_i32_0 = arith.constant 0 : i32
    %c0_i32_1 = arith.constant 0 : i32
    return %arg1, %c0_i32, %c0_i32_0 : i32, i32, i32
  }
  func.func @transform_8(%arg0: i32, %arg1: i32) -> (i32, i32, i32) {
    %c0_i32 = arith.constant 0 : i32
    %c0_i32_0 = arith.constant 0 : i32
    %c0_i32_1 = arith.constant 0 : i32
    return %arg1, %c0_i32, %c0_i32_0 : i32, i32, i32
  }
  func.func @transform_9(%arg0: i32, %arg1: i32) -> (i32, i32, i32) {
    %c0_i32 = arith.constant 0 : i32
    %c0_i32_0 = arith.constant 0 : i32
    %c0_i32_1 = arith.constant 0 : i32
    return %arg1, %c0_i32, %c0_i32_0 : i32, i32, i32
  }
  func.func @transform_10(%arg0: i32, %arg1: i32) -> (i32, i32, i32) {
    %c0_i32 = arith.constant 0 : i32
    %c0_i32_0 = arith.constant 0 : i32
    %c0_i32_1 = arith.constant 0 : i32
    return %arg1, %c0_i32, %c0_i32_0 : i32, i32, i32
  }
  func.func @transform_11(%arg0: i32, %arg1: i32) -> (i32, i32, i32) {
    %c0_i32 = arith.constant 0 : i32
    %c0_i32_0 = arith.constant 0 : i32
    %c0_i32_1 = arith.constant 0 : i32
    return %arg1, %c0_i32, %c0_i32_0 : i32, i32, i32
  }
  func.func @transform_12(%arg0: i32, %arg1: i32) -> (i32, i32, i32) {
    %c0_i32 = arith.constant 0 : i32
    %c0_i32_0 = arith.constant 0 : i32
    %c0_i32_1 = arith.constant 0 : i32
    return %arg1, %c0_i32, %c0_i32_0 : i32, i32, i32
  }
  func.func @transform_13(%arg0: i32, %arg1: i32) -> (i32, i32, i32) {
    %c0_i32 = arith.constant 0 : i32
    %c0_i32_0 = arith.constant 0 : i32
    %c0_i32_1 = arith.constant 0 : i32
    return %arg0, %c0_i32, %c0_i32_0 : i32, i32, i32
  }
  func.func @transform_14(%arg0: i32, %arg1: i32) -> (i32, i32, i32, i32, i32) {
    %c0_i32 = arith.constant 0 : i32
    %c0_i32_0 = arith.constant 0 : i32
    %c0_i32_1 = arith.constant 0 : i32
    %c0_i32_2 = arith.constant 0 : i32
    return %arg1, %arg0, %c0_i32, %c0_i32_0, %c0_i32_1 : i32, i32, i32, i32, i32
  }
}

</mosaic_0001>

<llo_original>
// kernel: encoder_forward.1
$region0: #{encoder_forward.1}
  #allocation0 [shape = 'u32[]', space=smem, size = 0x4, offset = 0x4, fixed_abs, tag = 'smem constant byte address 0x4 - core index']
  #allocation1 [shape = 'u32[144,128]{1,0:T(1,128)}', space=vmem, size = 0x12000, scoped, tag = 'internal scratch']
  #allocation2 [shape = 'f32[8,32]{1,0:T(8,128)}', space=vmem, size = 0x1000, scoped, tag = 'scratch operand']
  %s0 = inlined_call_operand.vmem [shape: f32[2,8,32], index: 0, kind: input, shape index: {}]
  %s1 = inlined_call_operand.vmem [shape: f32[1,8,32], index: 1, kind: input, shape index: {}]
  %s2 = inlined_call_operand.vmem [shape: f32[2,1,32], index: 2, kind: input, shape index: {}]
  %s3 = inlined_call_operand.vmem [shape: f32[2,1,32], index: 3, kind: input, shape index: {}]
  %s4 = inlined_call_operand.vmem [shape: f32[2,32,96], index: 4, kind: input, shape index: {}]
  %s5 = inlined_call_operand.vmem [shape: f32[2,32,32], index: 5, kind: input, shape index: {}]
  %s6 = inlined_call_operand.vmem [shape: f32[2,1,32], index: 6, kind: input, shape index: {}]
  %s7 = inlined_call_operand.vmem [shape: f32[2,1,32], index: 7, kind: input, shape index: {}]
  %s8 = inlined_call_operand.vmem [shape: f32[2,1,32], index: 8, kind: input, shape index: {}]
  %s9 = inlined_call_operand.vmem [shape: f32[2,32,64], index: 9, kind: input, shape index: {}]
  %s10 = inlined_call_operand.vmem [shape: f32[2,1,64], index: 10, kind: input, shape index: {}]
  %s11 = inlined_call_operand.vmem [shape: f32[2,64,32], index: 11, kind: input, shape index: {}]
  %s12 = inlined_call_operand.vmem [shape: f32[2,1,32], index: 12, kind: input, shape index: {}]
  %s13 = inlined_call_operand.hbm [shape: f32[2,1,32], index: 13, kind: output, shape index: {0}]
  %s14 = inlined_call_operand.vmem [shape: f32[2,2,4,8,8], index: 14, kind: output, shape index: {1}]
  %15 = xla_tuple %s13, %s14
  %s16 = sld [smem:[#allocation0]]
  $region101: #{encoder_forward.1} parent=0
    _
  %s18 = ssub.s32 1, %s16
  %s19 = scalar_select 0, %s18, %s16
  $region1: #{encoder_forward.1} parent=0
    #allocation3 [shape = 'u8[1024]{0}', space=vmem, size = 0x400, scoped, tag = 'output window, operand 0']
    #allocation4 [shape = 's32[2]{0}', space=sflag, size = 0x8, scoped, tag = 'scoped memory for encoder_forward.1']
    %20 = vsyncpa [#allocation4], 0
    %s21 = scalar_lea.sflag [#allocation4], 1
    %22 = vsyncpa %s21, 0
    loop: start=0, step=1, limit=6
    $region2: #{encoder_forward.1} parent=1 // loop_pre_header
      _
    $region3: #{encoder_forward.1} parent=1 // loop_header
      %s24 = sphi 0, %s28
      %p25 = scmp.ge.s32.totalorder %s24, 6
      %s31 = sphi 0, %s43
      %s32 = sphi 0, %s39
      %s33 = sphi 0, %s31
      %s34 = sphi 0, %s32
      %s35 = sphi 0, %s33
      %s36 = sphi 0, %s34
      %s46 = sphi 0, %s48
      %s49 = sphi 0, %s46
      %s50 = sphi 0, %s49
      %s66 = sphi 0, %s50
      %s70 = sphi 0, %s70
      %s72 = sphi 0, %s70
      %s73 = sphi 0, %s72
      %s87 = sphi 0, %s73
      %s93 = sphi 0, %s95
      %s96 = sphi 0, %s93
      %s97 = sphi 0, %s96
      %s113 = sphi 0, %s97
      %s119 = sphi 0, %s121
      %s122 = sphi 0, %s119
      %s123 = sphi 0, %s122
      %s139 = sphi 0, %s123
      %s145 = sphi 0, %s147
      %s148 = sphi 0, %s145
      %s149 = sphi 0, %s148
      %s165 = sphi 0, %s149
      %s171 = sphi 0, %s173
      %s174 = sphi 0, %s171
      %s175 = sphi 0, %s174
      %s191 = sphi 0, %s175
      %s197 = sphi 0, %s199
      %s200 = sphi 0, %s197
      %s201 = sphi 0, %s200
      %s217 = sphi 0, %s201
      %s223 = sphi 0, %s225
      %s226 = sphi 0, %s223
      %s227 = sphi 0, %s226
      %s243 = sphi 0, %s227
      %s249 = sphi 0, %s251
      %s252 = sphi 0, %s249
      %s253 = sphi 0, %s252
      %s269 = sphi 0, %s253
      %s275 = sphi 0, %s277
      %s278 = sphi 0, %s275
      %s279 = sphi 0, %s278
      %s295 = sphi 0, %s279
      %s301 = sphi 0, %s303
      %s304 = sphi 0, %s301
      %s305 = sphi 0, %s304
      %s321 = sphi 0, %s305
      %s327 = sphi 0, %s329
      %s330 = sphi 0, %s327
      %s331 = sphi 0, %s330
      %s347 = sphi 0, %s331
      %s353 = sphi 0, %s355
      %s356 = sphi 0, %s353
      %s357 = sphi 0, %s356
      %s373 = sphi 0, %s357
      %s379 = sphi 0, %s381
      %s382 = sphi 0, %s379
      %s383 = sphi 0, %s382
      %s399 = sphi 0, %s383
      %s407 = sphi 0, %s409
      %s410 = sphi 0, %s407
      %s411 = sphi 0, %s410
      %s427 = sphi 0, %s411
    $region4: #{encoder_forward.1} parent=1 // loop_header_branch
      %27 = sbr.rel (%p25) target = $region8
    $region5: #{encoder_forward.1} parent=1 // loop_body
      %s29 = ssub.s32 %s24, 1
      %s30 = ssub.s32 %s24, 2
      %s37 = sadd.s32 1, %s32
      %p38 = scmp.ge.s32.totalorder %s37, 2
      %s39 = scalar_select %p38, 0, %s37
      %s40 = sadd.s32 1, %s31
      %s41 = scalar_select %p38, %s40, %s31
      %p42 = scmp.ge.s32.totalorder %s41, 2
      %s43 = scalar_select %p42, 0, %s41
      %s44 = ssub.s32 %s31, %s43
      %p45 = scmp.eq.s32.totalorder %s44, 0
      %s47 = sadd.s32 %s46, 1
      %s48 = scalar_select %p45, %s46, %s47
      %p51 = pneg %p45
      %p52 = scmp.eq.s32.totalorder %s24, 3
      %p53 = por %p51, %p52
      %p54 = scmp.ne.s32.totalorder %s46, %s49
      %p55 = scmp.eq.s32.totalorder %s24, 0
      %p56 = por %p54, %p55
      %p57 = scmp.ne.s32.totalorder %s46, %s49
      %p58 = scmp.eq.s32.totalorder %s29, 3
      %p59 = por %p57, %p58
      %p60 = scmp.ne.s32.totalorder %s49, %s50
      %p61 = scmp.eq.s32.totalorder %s29, 0
      %p62 = por %p60, %p61
      %p63 = scmp.ne.s32.totalorder %s49, %s50
      %p64 = scmp.eq.s32.totalorder %s30, 3
      %p65 = por %p63, %p64
      %p67 = scmp.ne.s32.totalorder %s50, %s66
      %p68 = scmp.eq.s32.totalorder %s30, 0
      %p69 = por %p67, %p68
      %s71 = sadd.s32 %s70, 1
      %p74 = scmp.eq.s32.totalorder %s24, 3
      %p75 = scmp.ne.s32.totalorder %s70, %s72
      %p76 = scmp.eq.s32.totalorder %s24, 0
      %p77 = por %p75, %p76
      %p78 = scmp.ne.s32.totalorder %s70, %s72
      %p79 = scmp.eq.s32.totalorder %s29, 3
      %p80 = por %p78, %p79
      %p81 = scmp.ne.s32.totalorder %s72, %s73
      %p82 = scmp.eq.s32.totalorder %s29, 0
      %p83 = por %p81, %p82
      %p84 = scmp.ne.s32.totalorder %s72, %s73
      %p85 = scmp.eq.s32.totalorder %s30, 3
      %p86 = por %p84, %p85
      %p88 = scmp.ne.s32.totalorder %s73, %s87
      %p89 = scmp.eq.s32.totalorder %s30, 0
      %p90 = por %p88, %p89
      %s91 = ssub.s32 %s32, %s39
      %p92 = scmp.eq.s32.totalorder %s91, 0
      %s94 = sadd.s32 %s93, 1
      %s95 = scalar_select %p92, %s93, %s94
      %p98 = pneg %p92
      %p99 = scmp.eq.s32.totalorder %s24, 3
      %p100 = por %p98, %p99
      %p101 = scmp.ne.s32.totalorder %s93, %s96
      %p102 = scmp.eq.s32.totalorder %s24, 0
      %p103 = por %p101, %p102
      %p104 = scmp.ne.s32.totalorder %s93, %s96
      %p105 = scmp.eq.s32.totalorder %s29, 3
      %p106 = por %p104, %p105
      %p107 = scmp.ne.s32.totalorder %s96, %s97
      %p108 = scmp.eq.s32.totalorder %s29, 0
      %p109 = por %p107, %p108
      %p110 = scmp.ne.s32.totalorder %s96, %s97
      %p111 = scmp.eq.s32.totalorder %s30, 3
      %p112 = por %p110, %p111
      %p114 = scmp.ne.s32.totalorder %s97, %s113
      %p115 = scmp.eq.s32.totalorder %s30, 0
      %p116 = por %p114, %p115
      %s117 = ssub.s32 %s32, %s39
      %p118 = scmp.eq.s32.totalorder %s117, 0
      %s120 = sadd.s32 %s119, 1
      %s121 = scalar_select %p118, %s119, %s120
      %p124 = pneg %p118
      %p125 = scmp.eq.s32.totalorder %s24, 3
      %p126 = por %p124, %p125
      %p127 = scmp.ne.s32.totalorder %s119, %s122
      %p128 = scmp.eq.s32.totalorder %s24, 0
      %p129 = por %p127, %p128
      %p130 = scmp.ne.s32.totalorder %s119, %s122
      %p131 = scmp.eq.s32.totalorder %s29, 3
      %p132 = por %p130, %p131
      %p133 = scmp.ne.s32.totalorder %s122, %s123
      %p134 = scmp.eq.s32.totalorder %s29, 0
      %p135 = por %p133, %p134
      %p136 = scmp.ne.s32.totalorder %s122, %s123
      %p137 = scmp.eq.s32.totalorder %s30, 3
      %p138 = por %p136, %p137
      %p140 = scmp.ne.s32.totalorder %s123, %s139
      %p141 = scmp.eq.s32.totalorder %s30, 0
      %p142 = por %p140, %p141
      %s143 = ssub.s32 %s32, %s39
      %p144 = scmp.eq.s32.totalorder %s143, 0
      %s146 = sadd.s32 %s145, 1
      %s147 = scalar_select %p144, %s145, %s146
      %p150 = pneg %p144
      %p151 = scmp.eq.s32.totalorder %s24, 3
      %p152 = por %p150, %p151
      %p153 = scmp.ne.s32.totalorder %s145, %s148
      %p154 = scmp.eq.s32.totalorder %s24, 0
      %p155 = por %p153, %p154
      %p156 = scmp.ne.s32.totalorder %s145, %s148
      %p157 = scmp.eq.s32.totalorder %s29, 3
      %p158 = por %p156, %p157
      %p159 = scmp.ne.s32.totalorder %s148, %s149
      %p160 = scmp.eq.s32.totalorder %s29, 0
      %p161 = por %p159, %p160
      %p162 = scmp.ne.s32.totalorder %s148, %s149
      %p163 = scmp.eq.s32.totalorder %s30, 3
      %p164 = por %p162, %p163
      %p166 = scmp.ne.s32.totalorder %s149, %s165
      %p167 = scmp.eq.s32.totalorder %s30, 0
      %p168 = por %p166, %p167
      %s169 = ssub.s32 %s32, %s39
      %p170 = scmp.eq.s32.totalorder %s169, 0
      %s172 = sadd.s32 %s171, 1
      %s173 = scalar_select %p170, %s171, %s172
      %p176 = pneg %p170
      %p177 = scmp.eq.s32.totalorder %s24, 3
      %p178 = por %p176, %p177
      %p179 = scmp.ne.s32.totalorder %s171, %s174
      %p180 = scmp.eq.s32.totalorder %s24, 0
      %p181 = por %p179, %p180
      %p182 = scmp.ne.s32.totalorder %s171, %s174
      %p183 = scmp.eq.s32.totalorder %s29, 3
      %p184 = por %p182, %p183
      %p185 = scmp.ne.s32.totalorder %s174, %s175
      %p186 = scmp.eq.s32.totalorder %s29, 0
      %p187 = por %p185, %p186
      %p188 = scmp.ne.s32.totalorder %s174, %s175
      %p189 = scmp.eq.s32.totalorder %s30, 3
      %p190 = por %p188, %p189
      %p192 = scmp.ne.s32.totalorder %s175, %s191
      %p193 = scmp.eq.s32.totalorder %s30, 0
      %p194 = por %p192, %p193
      %s195 = ssub.s32 %s32, %s39
      %p196 = scmp.eq.s32.totalorder %s195, 0
      %s198 = sadd.s32 %s197, 1
      %s199 = scalar_select %p196, %s197, %s198
      %p202 = pneg %p196
      %p203 = scmp.eq.s32.totalorder %s24, 3
      %p204 = por %p202, %p203
      %p205 = scmp.ne.s32.totalorder %s197, %s200
      %p206 = scmp.eq.s32.totalorder %s24, 0
      %p207 = por %p205, %p206
      %p208 = scmp.ne.s32.totalorder %s197, %s200
      %p209 = scmp.eq.s32.totalorder %s29, 3
      %p210 = por %p208, %p209
      %p211 = scmp.ne.s32.totalorder %s200, %s201
      %p212 = scmp.eq.s32.totalorder %s29, 0
      %p213 = por %p211, %p212
      %p214 = scmp.ne.s32.totalorder %s200, %s201
      %p215 = scmp.eq.s32.totalorder %s30, 3
      %p216 = por %p214, %p215
      %p218 = scmp.ne.s32.totalorder %s201, %s217
      %p219 = scmp.eq.s32.totalorder %s30, 0
      %p220 = por %p218, %p219
      %s221 = ssub.s32 %s32, %s39
      %p222 = scmp.eq.s32.totalorder %s221, 0
      %s224 = sadd.s32 %s223, 1
      %s225 = scalar_select %p222, %s223, %s224
      %p228 = pneg %p222
      %p229 = scmp.eq.s32.totalorder %s24, 3
      %p230 = por %p228, %p229
      %p231 = scmp.ne.s32.totalorder %s223, %s226
      %p232 = scmp.eq.s32.totalorder %s24, 0
      %p233 = por %p231, %p232
      %p234 = scmp.ne.s32.totalorder %s223, %s226
      %p235 = scmp.eq.s32.totalorder %s29, 3
      %p236 = por %p234, %p235
      %p237 = scmp.ne.s32.totalorder %s226, %s227
      %p238 = scmp.eq.s32.totalorder %s29, 0
      %p239 = por %p237, %p238
      %p240 = scmp.ne.s32.totalorder %s226, %s227
      %p241 = scmp.eq.s32.totalorder %s30, 3
      %p242 = por %p240, %p241
      %p244 = scmp.ne.s32.totalorder %s227, %s243
      %p245 = scmp.eq.s32.totalorder %s30, 0
      %p246 = por %p244, %p245
      %s247 = ssub.s32 %s32, %s39
      %p248 = scmp.eq.s32.totalorder %s247, 0
      %s250 = sadd.s32 %s249, 1
      %s251 = scalar_select %p248, %s249, %s250
      %p254 = pneg %p248
      %p255 = scmp.eq.s32.totalorder %s24, 3
      %p256 = por %p254, %p255
      %p257 = scmp.ne.s32.totalorder %s249, %s252
      %p258 = scmp.eq.s32.totalorder %s24, 0
      %p259 = por %p257, %p258
      %p260 = scmp.ne.s32.totalorder %s249, %s252
      %p261 = scmp.eq.s32.totalorder %s29, 3
      %p262 = por %p260, %p261
      %p263 = scmp.ne.s32.totalorder %s252, %s253
      %p264 = scmp.eq.s32.totalorder %s29, 0
      %p265 = por %p263, %p264
      %p266 = scmp.ne.s32.totalorder %s252, %s253
      %p267 = scmp.eq.s32.totalorder %s30, 3
      %p268 = por %p266, %p267
      %p270 = scmp.ne.s32.totalorder %s253, %s269
      %p271 = scmp.eq.s32.totalorder %s30, 0
      %p272 = por %p270, %p271
      %s273 = ssub.s32 %s32, %s39
      %p274 = scmp.eq.s32.totalorder %s273, 0
      %s276 = sadd.s32 %s275, 1
      %s277 = scalar_select %p274, %s275, %s276
      %p280 = pneg %p274
      %p281 = scmp.eq.s32.totalorder %s24, 3
      %p282 = por %p280, %p281
      %p283 = scmp.ne.s32.totalorder %s275, %s278
      %p284 = scmp.eq.s32.totalorder %s24, 0
      %p285 = por %p283, %p284
      %p286 = scmp.ne.s32.totalorder %s275, %s278
      %p287 = scmp.eq.s32.totalorder %s29, 3
      %p288 = por %p286, %p287
      %p289 = scmp.ne.s32.totalorder %s278, %s279
      %p290 = scmp.eq.s32.totalorder %s29, 0
      %p291 = por %p289, %p290
      %p292 = scmp.ne.s32.totalorder %s278, %s279
      %p293 = scmp.eq.s32.totalorder %s30, 3
      %p294 = por %p292, %p293
      %p296 = scmp.ne.s32.totalorder %s279, %s295
      %p297 = scmp.eq.s32.totalorder %s30, 0
      %p298 = por %p296, %p297
      %s299 = ssub.s32 %s32, %s39
      %p300 = scmp.eq.s32.totalorder %s299, 0
      %s302 = sadd.s32 %s301, 1
      %s303 = scalar_select %p300, %s301, %s302
      %p306 = pneg %p300
      %p307 = scmp.eq.s32.totalorder %s24, 3
      %p308 = por %p306, %p307
      %p309 = scmp.ne.s32.totalorder %s301, %s304
      %p310 = scmp.eq.s32.totalorder %s24, 0
      %p311 = por %p309, %p310
      %p312 = scmp.ne.s32.totalorder %s301, %s304
      %p313 = scmp.eq.s32.totalorder %s29, 3
      %p314 = por %p312, %p313
      %p315 = scmp.ne.s32.totalorder %s304, %s305
      %p316 = scmp.eq.s32.totalorder %s29, 0
      %p317 = por %p315, %p316
      %p318 = scmp.ne.s32.totalorder %s304, %s305
      %p319 = scmp.eq.s32.totalorder %s30, 3
      %p320 = por %p318, %p319
      %p322 = scmp.ne.s32.totalorder %s305, %s321
      %p323 = scmp.eq.s32.totalorder %s30, 0
      %p324 = por %p322, %p323
      %s325 = ssub.s32 %s32, %s39
      %p326 = scmp.eq.s32.totalorder %s325, 0
      %s328 = sadd.s32 %s327, 1
      %s329 = scalar_select %p326, %s327, %s328
      %p332 = pneg %p326
      %p333 = scmp.eq.s32.totalorder %s24, 3
      %p334 = por %p332, %p333
      %p335 = scmp.ne.s32.totalorder %s327, %s330
      %p336 = scmp.eq.s32.totalorder %s24, 0
      %p337 = por %p335, %p336
      %p338 = scmp.ne.s32.totalorder %s327, %s330
      %p339 = scmp.eq.s32.totalorder %s29, 3
      %p340 = por %p338, %p339
      %p341 = scmp.ne.s32.totalorder %s330, %s331
      %p342 = scmp.eq.s32.totalorder %s29, 0
      %p343 = por %p341, %p342
      %p344 = scmp.ne.s32.totalorder %s330, %s331
      %p345 = scmp.eq.s32.totalorder %s30, 3
      %p346 = por %p344, %p345
      %p348 = scmp.ne.s32.totalorder %s331, %s347
      %p349 = scmp.eq.s32.totalorder %s30, 0
      %p350 = por %p348, %p349
      %s351 = ssub.s32 %s32, %s39
      %p352 = scmp.eq.s32.totalorder %s351, 0
      %s354 = sadd.s32 %s353, 1
      %s355 = scalar_select %p352, %s353, %s354
      %p358 = pneg %p352
      %p359 = scmp.eq.s32.totalorder %s24, 3
      %p360 = por %p358, %p359
      %p361 = scmp.ne.s32.totalorder %s353, %s356
      %p362 = scmp.eq.s32.totalorder %s24, 0
      %p363 = por %p361, %p362
      %p364 = scmp.ne.s32.totalorder %s353, %s356
      %p365 = scmp.eq.s32.totalorder %s29, 3
      %p366 = por %p364, %p365
      %p367 = scmp.ne.s32.totalorder %s356, %s357
      %p368 = scmp.eq.s32.totalorder %s29, 0
      %p369 = por %p367, %p368
      %p370 = scmp.ne.s32.totalorder %s356, %s357
      %p371 = scmp.eq.s32.totalorder %s30, 3
      %p372 = por %p370, %p371
      %p374 = scmp.ne.s32.totalorder %s357, %s373
      %p375 = scmp.eq.s32.totalorder %s30, 0
      %p376 = por %p374, %p375
      %s377 = ssub.s32 %s31, %s43
      %p378 = scmp.eq.s32.totalorder %s377, 0
      %s380 = sadd.s32 %s379, 1
      %s381 = scalar_select %p378, %s379, %s380
      %p384 = pneg %p378
      %p385 = scmp.eq.s32.totalorder %s24, 3
      %p386 = por %p384, %p385
      %p387 = scmp.ne.s32.totalorder %s379, %s382
      %p388 = scmp.eq.s32.totalorder %s24, 0
      %p389 = por %p387, %p388
      %p390 = scmp.ne.s32.totalorder %s379, %s382
      %p391 = scmp.eq.s32.totalorder %s29, 3
      %p392 = por %p390, %p391
      %p393 = scmp.ne.s32.totalorder %s382, %s383
      %p394 = scmp.eq.s32.totalorder %s29, 0
      %p395 = por %p393, %p394
      %p396 = scmp.ne.s32.totalorder %s382, %s383
      %p397 = scmp.eq.s32.totalorder %s30, 3
      %p398 = por %p396, %p397
      %p400 = scmp.ne.s32.totalorder %s383, %s399
      %p401 = scmp.eq.s32.totalorder %s30, 0
      %p402 = por %p400, %p401
      %s403 = ssub.s32 %s32, %s39
      %s404 = ssub.s32 %s31, %s43
      %s405 = sor.u32 %s403, %s404
      %p406 = scmp.eq.s32.totalorder %s405, 0
      %s408 = sadd.s32 %s407, 1
      %s409 = scalar_select %p406, %s407, %s408
      %p412 = pneg %p406
      %p413 = scmp.eq.s32.totalorder %s24, 3
      %p414 = por %p412, %p413
      %p415 = scmp.ne.s32.totalorder %s407, %s410
      %p416 = scmp.eq.s32.totalorder %s24, 0
      %p417 = por %p415, %p416
      %p418 = scmp.ne.s32.totalorder %s407, %s410
      %p419 = scmp.eq.s32.totalorder %s29, 3
      %p420 = por %p418, %p419
      %p421 = scmp.ne.s32.totalorder %s410, %s411
      %p422 = scmp.eq.s32.totalorder %s29, 0
      %p423 = por %p421, %p422
      %p424 = scmp.ne.s32.totalorder %s410, %s411
      %p425 = scmp.eq.s32.totalorder %s30, 3
      %p426 = por %p424, %p425
      %p428 = scmp.ne.s32.totalorder %s411, %s427
      %p429 = scmp.eq.s32.totalorder %s30, 0
      %p430 = por %p428, %p429
      %p431 = scmp.le.s32.totalorder 1, %s24
      %p432 = scmp.lt.s32.totalorder %s24, 5
      %p433 = pnand %p431, %p432
      %p434 = pneg %p433
      // Predicated region
      $region9: #{encoder_forward.1} parent=5 // pred_check
        _
      $region10: #{encoder_forward.1} parent=5 // pred_check_branch
        %436 = sbr.rel (%p433) target = $region12
      $region11: #{encoder_forward.1} parent=5 // pred_region
        %s437 = ssub.s32 %s24, 1
        // Predicated region
        $region13: #{encoder_forward.1} parent=11 // pred_check
          %p438 = pneg %p83
        $region14: #{encoder_forward.1} parent=11 // pred_check_branch
          %440 = sbr.rel (%p438) target = $region16
        $region15: #{encoder_forward.1} parent=11 // pred_region
          _
        $region16: #{encoder_forward.1} parent=11 // pred_fallthru
          _
      $region12: #{encoder_forward.1} parent=5 // pred_fallthru
        _
      %p441 = scmp.lt.s32.totalorder %s24, 4
      // Predicated region
      $region17: #{encoder_forward.1} parent=5 // pred_check
        %p442 = pneg %p441
      $region18: #{encoder_forward.1} parent=5 // pred_check_branch
        %444 = sbr.rel (%p442) target = $region20
      $region19: #{encoder_forward.1} parent=5 // pred_region
        // Predicated region
        $region21: #{encoder_forward.1} parent=19 // pred_check
          %p445 = pneg %p56
        $region22: #{encoder_forward.1} parent=19 // pred_check_branch
          %447 = sbr.rel (%p445) target = $region24
        $region23: #{encoder_forward.1} parent=19 // pred_region
          %p448 = scmp.lt.s32.totalorder %s31, 1
          %s449 = scalar_select %p448, %s31, 1
          %s450 = smul.addr %s449, 8
          %s451 = scalar_lea.vmem %s0, %s450
        $region24: #{encoder_forward.1} parent=19 // pred_fallthru
          _
        // Predicated region
        $region25: #{encoder_forward.1} parent=19 // pred_check
          %p452 = pneg %p103
        $region26: #{encoder_forward.1} parent=19 // pred_check_branch
          %454 = sbr.rel (%p452) target = $region28
        $region27: #{encoder_forward.1} parent=19 // pred_region
          %p455 = scmp.lt.s32.totalorder %s32, 1
          %s456 = scalar_select %p455, %s32, 1
          %s457 = scalar_lea.vmem %s2, %s456
        $region28: #{encoder_forward.1} parent=19 // pred_fallthru
          _
        // Predicated region
        $region29: #{encoder_forward.1} parent=19 // pred_check
          %p458 = pneg %p129
        $region30: #{encoder_forward.1} parent=19 // pred_check_branch
          %460 = sbr.rel (%p458) target = $region32
        $region31: #{encoder_forward.1} parent=19 // pred_region
          %p461 = scmp.lt.s32.totalorder %s32, 1
          %s462 = scalar_select %p461, %s32, 1
          %s463 = scalar_lea.vmem %s3, %s462
        $region32: #{encoder_forward.1} parent=19 // pred_fallthru
          _
        // Predicated region
        $region33: #{encoder_forward.1} parent=19 // pred_check
          %p464 = pneg %p155
        $region34: #{encoder_forward.1} parent=19 // pred_check_branch
          %466 = sbr.rel (%p464) target = $region36
        $region35: #{encoder_forward.1} parent=19 // pred_region
          %p467 = scmp.lt.s32.totalorder %s32, 1
          %s468 = scalar_select %p467, %s32, 1
          %s469 = smul.addr %s468, 4
          %s470 = smul.addr %s469, 8
          %s471 = scalar_lea.vmem %s4, %s470
        $region36: #{encoder_forward.1} parent=19 // pred_fallthru
          _
        // Predicated region
        $region37: #{encoder_forward.1} parent=19 // pred_check
          %p472 = pneg %p181
        $region38: #{encoder_forward.1} parent=19 // pred_check_branch
          %474 = sbr.rel (%p472) target = $region40
        $region39: #{encoder_forward.1} parent=19 // pred_region
          %p475 = scmp.lt.s32.totalorder %s32, 1
          %s476 = scalar_select %p475, %s32, 1
          %s477 = smul.addr %s476, 4
          %s478 = smul.addr %s477, 8
          %s479 = scalar_lea.vmem %s5, %s478
        $region40: #{encoder_forward.1} parent=19 // pred_fallthru
          _
        // Predicated region
        $region41: #{encoder_forward.1} parent=19 // pred_check
          %p480 = pneg %p207
        $region42: #{encoder_forward.1} parent=19 // pred_check_branch
          %482 = sbr.rel (%p480) target = $region44
        $region43: #{encoder_forward.1} parent=19 // pred_region
          %p483 = scmp.lt.s32.totalorder %s32, 1
          %s484 = scalar_select %p483, %s32, 1
          %s485 = scalar_lea.vmem %s6, %s484
        $region44: #{encoder_forward.1} parent=19 // pred_fallthru
          _
        // Predicated region
        $region45: #{encoder_forward.1} parent=19 // pred_check
          %p486 = pneg %p233
        $region46: #{encoder_forward.1} parent=19 // pred_check_branch
          %488 = sbr.rel (%p486) target = $region48
        $region47: #{encoder_forward.1} parent=19 // pred_region
          %p489 = scmp.lt.s32.totalorder %s32, 1
          %s490 = scalar_select %p489, %s32, 1
          %s491 = scalar_lea.vmem %s7, %s490
        $region48: #{encoder_forward.1} parent=19 // pred_fallthru
          _
        // Predicated region
        $region49: #{encoder_forward.1} parent=19 // pred_check
          %p492 = pneg %p259
        $region50: #{encoder_forward.1} parent=19 // pred_check_branch
          %494 = sbr.rel (%p492) target = $region52
        $region51: #{encoder_forward.1} parent=19 // pred_region
          %p495 = scmp.lt.s32.totalorder %s32, 1
          %s496 = scalar_select %p495, %s32, 1
          %s497 = scalar_lea.vmem %s8, %s496
        $region52: #{encoder_forward.1} parent=19 // pred_fallthru
          _
        // Predicated region
        $region53: #{encoder_forward.1} parent=19 // pred_check
          %p498 = pneg %p285
        $region54: #{encoder_forward.1} parent=19 // pred_check_branch
          %500 = sbr.rel (%p498) target = $region56
        $region55: #{encoder_forward.1} parent=19 // pred_region
          %p501 = scmp.lt.s32.totalorder %s32, 1
          %s502 = scalar_select %p501, %s32, 1
          %s503 = smul.addr %s502, 4
          %s504 = smul.addr %s503, 8
          %s505 = scalar_lea.vmem %s9, %s504
        $region56: #{encoder_forward.1} parent=19 // pred_fallthru
          _
        // Predicated region
        $region57: #{encoder_forward.1} parent=19 // pred_check
          %p506 = pneg %p311
        $region58: #{encoder_forward.1} parent=19 // pred_check_branch
          %508 = sbr.rel (%p506) target = $region60
        $region59: #{encoder_forward.1} parent=19 // pred_region
          %p509 = scmp.lt.s32.totalorder %s32, 1
          %s510 = scalar_select %p509, %s32, 1
          %s511 = scalar_lea.vmem %s10, %s510
        $region60: #{encoder_forward.1} parent=19 // pred_fallthru
          _
        // Predicated region
        $region61: #{encoder_forward.1} parent=19 // pred_check
          %p512 = pneg %p337
        $region62: #{encoder_forward.1} parent=19 // pred_check_branch
          %514 = sbr.rel (%p512) target = $region64
        $region63: #{encoder_forward.1} parent=19 // pred_region
          %p515 = scmp.lt.s32.totalorder %s32, 1
          %s516 = scalar_select %p515, %s32, 1
          %s517 = smul.addr %s516, 8
          %s518 = smul.addr %s517, 8
          %s519 = scalar_lea.vmem %s11, %s518
        $region64: #{encoder_forward.1} parent=19 // pred_fallthru
          _
        // Predicated region
        $region65: #{encoder_forward.1} parent=19 // pred_check
          %p520 = pneg %p363
        $region66: #{encoder_forward.1} parent=19 // pred_check_branch
          %522 = sbr.rel (%p520) target = $region68
        $region67: #{encoder_forward.1} parent=19 // pred_region
          %p523 = scmp.lt.s32.totalorder %s32, 1
          %s524 = scalar_select %p523, %s32, 1
          %s525 = scalar_lea.vmem %s12, %s524
        $region68: #{encoder_forward.1} parent=19 // pred_fallthru
          _
      $region20: #{encoder_forward.1} parent=5 // pred_fallthru
        _
      %p526 = scmp.le.s32.totalorder 1, %s24
      %p527 = scmp.lt.s32.totalorder %s24, 5
      %p528 = pnand %p526, %p527
      %p529 = pneg %p528
      // Predicated region
      $region69: #{encoder_forward.1} parent=5 // pred_check
        _
      $region70: #{encoder_forward.1} parent=5 // pred_check_branch
        %531 = sbr.rel (%p528) target = $region72
      $region71: #{encoder_forward.1} parent=5 // pred_region
        %s532 = ssub.s32 %s24, 1
        %p533 = scmp.lt.s32.totalorder %s33, 1
        %s534 = scalar_select %p533, %s33, 1
        %s535 = smul.addr %s534, 8
        %s536 = scalar_lea.vmem %s0, %s535
        %p537 = pneg %p62
        %p538 = pneg %p59
        %p539 = pneg %p83
        %p540 = pneg %p80
        %p541 = scmp.lt.s32.totalorder %s34, 1
        %s542 = scalar_select %p541, %s34, 1
        %s543 = scalar_lea.vmem %s2, %s542
        %p544 = pneg %p109
        %p545 = pneg %p106
        %p546 = scmp.lt.s32.totalorder %s34, 1
        %s547 = scalar_select %p546, %s34, 1
        %s548 = scalar_lea.vmem %s3, %s547
        %p549 = pneg %p135
        %p550 = pneg %p132
        %p551 = scmp.lt.s32.totalorder %s34, 1
        %s552 = scalar_select %p551, %s34, 1
        %s553 = smul.addr %s552, 4
        %s554 = smul.addr %s553, 8
        %s555 = scalar_lea.vmem %s4, %s554
        %p556 = pneg %p161
        %p557 = pneg %p158
        %p558 = scmp.lt.s32.totalorder %s34, 1
        %s559 = scalar_select %p558, %s34, 1
        %s560 = smul.addr %s559, 4
        %s561 = smul.addr %s560, 8
        %s562 = scalar_lea.vmem %s5, %s561
        %p563 = pneg %p187
        %p564 = pneg %p184
        %p565 = scmp.lt.s32.totalorder %s34, 1
        %s566 = scalar_select %p565, %s34, 1
        %s567 = scalar_lea.vmem %s6, %s566
        %p568 = pneg %p213
        %p569 = pneg %p210
        %p570 = scmp.lt.s32.totalorder %s34, 1
        %s571 = scalar_select %p570, %s34, 1
        %s572 = scalar_lea.vmem %s7, %s571
        %p573 = pneg %p239
        %p574 = pneg %p236
        %p575 = scmp.lt.s32.totalorder %s34, 1
        %s576 = scalar_select %p575, %s34, 1
        %s577 = scalar_lea.vmem %s8, %s576
        %p578 = pneg %p265
        %p579 = pneg %p262
        %p580 = scmp.lt.s32.totalorder %s34, 1
        %s581 = scalar_select %p580, %s34, 1
        %s582 = smul.addr %s581, 4
        %s583 = smul.addr %s582, 8
        %s584 = scalar_lea.vmem %s9, %s583
        %p585 = pneg %p291
        %p586 = pneg %p288
        %p587 = scmp.lt.s32.totalorder %s34, 1
        %s588 = scalar_select %p587, %s34, 1
        %s589 = scalar_lea.vmem %s10, %s588
        %p590 = pneg %p317
        %p591 = pneg %p314
        %p592 = scmp.lt.s32.totalorder %s34, 1
        %s593 = scalar_select %p592, %s34, 1
        %s594 = smul.addr %s593, 8
        %s595 = smul.addr %s594, 8
        %s596 = scalar_lea.vmem %s11, %s595
        %p597 = pneg %p343
        %p598 = pneg %p340
        %p599 = scmp.lt.s32.totalorder %s34, 1
        %s600 = scalar_select %p599, %s34, 1
        %s601 = scalar_lea.vmem %s12, %s600
        %p602 = pneg %p369
        %p603 = pneg %p366
        %p604 = pneg %p395
        %p605 = pneg %p392
        %s606 = sand.u32 %s382, 1
        %s607 = scalar_lea.sflag [#allocation4], %s606
        %s608 = sand.u32 %s382, 1
        %s609 = scalar_lea.vmem [#allocation3], %s608
        %p610 = pneg %p423
        %p611 = pneg %p420
        %p612 = scmp.lt.s32.totalorder %s34, 1
        %s613 = scalar_select %p612, %s34, 1
        %p614 = scmp.lt.s32.totalorder %s33, 1
        %s615 = scalar_select %p614, %s33, 1
        %s616 = smul.addr %s615, 4
        %s617 = smul.addr %s613, 8
        %s618 = sadd.s32 %s616, %s617
        %s619 = smul.addr %s618, 8
        %s620 = scalar_lea.vmem %s14, %s619
        %p621 = scmp.lt.s32.totalorder %s33, 1
        %s622 = scalar_select %p621, %s33, 1
        %s623 = smul.addr %s622, 8
        %s624 = scalar_lea.vmem %s0, %s623
        %p625 = scmp.lt.s32.totalorder %s34, 1
        %s626 = scalar_select %p625, %s34, 1
        %s627 = scalar_lea.vmem %s2, %s626
        %p628 = scmp.lt.s32.totalorder %s34, 1
        %s629 = scalar_select %p628, %s34, 1
        %s630 = scalar_lea.vmem %s3, %s629
        %p631 = scmp.lt.s32.totalorder %s34, 1
        %s632 = scalar_select %p631, %s34, 1
        %s633 = smul.addr %s632, 4
        %s634 = smul.addr %s633, 8
        %s635 = scalar_lea.vmem %s4, %s634
        %p636 = scmp.lt.s32.totalorder %s34, 1
        %s637 = scalar_select %p636, %s34, 1
        %s638 = smul.addr %s637, 4
        %s639 = smul.addr %s638, 8
        %s640 = scalar_lea.vmem %s5, %s639
        %p641 = scmp.lt.s32.totalorder %s34, 1
        %s642 = scalar_select %p641, %s34, 1
        %s643 = scalar_lea.vmem %s6, %s642
        %p644 = scmp.lt.s32.totalorder %s34, 1
        %s645 = scalar_select %p644, %s34, 1
        %s646 = scalar_lea.vmem %s7, %s645
        %p647 = scmp.lt.s32.totalorder %s34, 1
        %s648 = scalar_select %p647, %s34, 1
        %s649 = scalar_lea.vmem %s8, %s648
        %p650 = scmp.lt.s32.totalorder %s34, 1
        %s651 = scalar_select %p650, %s34, 1
        %s652 = smul.addr %s651, 4
        %s653 = smul.addr %s652, 8
        %s654 = scalar_lea.vmem %s9, %s653
        %p655 = scmp.lt.s32.totalorder %s34, 1
        %s656 = scalar_select %p655, %s34, 1
        %s657 = scalar_lea.vmem %s10, %s656
        %p658 = scmp.lt.s32.totalorder %s34, 1
        %s659 = scalar_select %p658, %s34, 1
        %s660 = smul.addr %s659, 8
        %s661 = smul.addr %s660, 8
        %s662 = scalar_lea.vmem %s11, %s661
        %p663 = scmp.lt.s32.totalorder %s34, 1
        %s664 = scalar_select %p663, %s34, 1
        %s665 = scalar_lea.vmem %s12, %s664
        %p666 = scmp.lt.s32.totalorder %s34, 1
        %s667 = scalar_select %p666, %s34, 1
        %p668 = scmp.lt.s32.totalorder %s33, 1
        %s669 = scalar_select %p668, %s33, 1
        %s670 = smul.addr %s669, 4
        %s671 = smul.addr %s667, 8
        %s672 = sadd.s32 %s670, %s671
        %s673 = smul.addr %s672, 8
        %s674 = scalar_lea.vmem %s14, %s673
        %p675 = scmp.eq.s32.totalorder %s34, 0
        // Predicated region
        $region73: #{encoder_forward.1} parent=71 // pred_check
          %p676 = pneg %p675
        $region74: #{encoder_forward.1} parent=71 // pred_check_branch
          %678 = sbr.rel (%p676) target = $region76
        $region75: #{encoder_forward.1} parent=71 // pred_region
          %v679 = vld [vmem:[%s624] sm:$0xff]
          %v680 = vld [vmem:[%s1] sm:$0xff]
          %v681 = vadd.f32 %v679, %v680
          %vm682 = vcmask 261120
          %683 = vst.msk [vmem:[#allocation2] sm:$0xff] %vm682, %v681
        $region76: #{encoder_forward.1} parent=71 // pred_fallthru
          _
        %v684 = vld [vmem:[#allocation2] sm:$0xff]
        %v685 = vld [vmem:[%s627] sm:$0x1]
        %v686 = vld [vmem:[%s630] sm:$0x1]
        %vm687 = vcmask 261120
        %v688 = vsel %vm687, %v684, 0.0
        %689 = vadd.xlane.f32.xlu0 %v688
        %v690 = vpop.xlane.xlu0 %689
        %v691 = vrcp.pop 32.0
        %v692 = vmul.f32 %v690, %v691
        %v693 = vsub.f32 %v684, %v692
        %v694 = vmul.f32 %v693, %v693
        %v695 = vsel %vm687, %v694, 0.0
        %696 = vadd.xlane.f32.xlu0 %v695
        %v697 = vpop.xlane.xlu0 %696
        %v698 = vmul.f32 %v697, %v691
        %v699 = vadd.f32 %v698, 1e-05
        %v700 = vrsqrt.pop %v699
        %v701 = vmul.f32 %v693, %v700
        %v703 = vlaneseq
        %v704 = vshrl.u32 %v703, 7
        %v705 = vsub.s32 0, %v704
        %v706 = vrot.slane %v685, %v705
        %v708 = vmul.f32 %v701, %v706
        %v710 = vlaneseq
        %v711 = vshrl.u32 %v710, 7
        %v712 = vsub.s32 0, %v711
        %v713 = vrot.slane %v686, %v712
        %v715 = vadd.f32 %v708, %v713
        %v716 = vld [vmem:[%s635] sm:$0xff]
        %v717 = vld [vmem:[%s635 + $0x8] sm:$0xff]
        %v718 = vld [vmem:[%s635 + $0x10] sm:$0xff]
        %v719 = vld [vmem:[%s635 + $0x18] sm:$0xff]
        %v721 = vsel %vm687, %v715, 0
        %723 = vmatprep.subr.mxu0 0.0
        %724 = vmatpush1.msra.mxu0 %v716
        %725 = vmatprep.subr.mxu0 0.0
        %726 = vmatpush1.msra.mxu0 %v717
        %727 = vmatprep.subr.mxu0 0.0
        %728 = vmatpush1.msra.mxu0 %v718
        %729 = vmatprep.subr.mxu0 0.0
        %730 = vmatpush1.msra.mxu0 %v719
        %731 = vmatprep.subr.mxu0 0.0
        %732 = vmatpush1.msra.mxu0 0.0
        %733 = vmatprep.subr.mxu0 0.0
        %734 = vmatpush1.msra.mxu0 0.0
        %735 = vmatprep.subr.mxu0 0.0
        %736 = vmatpush1.msra.mxu0 0.0
        %737 = vmatprep.subr.mxu0 0.0
        %738 = vmatpush1.msra.mxu0 0.0
        %739 = vmatprep.subr.mxu0 0.0
        %740 = vmatpush1.msra.mxu0 0.0
        %741 = vmatprep.subr.mxu0 0.0
        %742 = vmatpush1.msra.mxu0 0.0
        %743 = vmatprep.subr.mxu0 0.0
        %744 = vmatpush1.msra.mxu0 0.0
        %745 = vmatprep.subr.mxu0 0.0
        %746 = vmatpush1.msra.mxu0 0.0
        %747 = vmatprep.subr.mxu0 0.0
        %748 = vmatpush1.msra.mxu0 0.0
        %749 = vmatprep.subr.mxu0 0.0
        %750 = vmatpush1.msra.mxu0 0.0
        %751 = vmatprep.subr.mxu0 0.0
        %752 = vmatpush1.msra.mxu0 0.0
        %753 = vmatprep.subr.mxu0 0.0
        %754 = vmatpush1.msra.mxu0 0.0
        %755 = vmatprep.subr.mxu0 0.0
        %756 = vmatpush1.msra.mxu0 0.0
        %757 = vmatprep.subr.mxu0 0.0
        %758 = vmatpush1.msra.mxu0 0.0
        %759 = vmatprep.subr.mxu0 0.0
        %760 = vmatpush1.msra.mxu0 0.0
        %761 = vmatprep.subr.mxu0 0.0
        %762 = vmatpush1.msra.mxu0 0.0
        %763 = vmatprep.subr.mxu0 0.0
        %764 = vmatpush1.msra.mxu0 0.0
        %765 = vmatprep.subr.mxu0 0.0
        %766 = vmatpush1.msra.mxu0 0.0
        %767 = vmatprep.subr.mxu0 0.0
        %768 = vmatpush1.msra.mxu0 0.0
        %769 = vmatprep.subr.mxu0 0.0
        %770 = vmatpush1.msra.mxu0 0.0
        %771 = vmatprep.subr.mxu0 0.0
        %772 = vmatpush1.msra.mxu0 0.0
        %773 = vmatprep.subr.mxu0 0.0
        %774 = vmatpush1.msra.mxu0 0.0
        %775 = vmatprep.subr.mxu0 0.0
        %776 = vmatpush1.msra.mxu0 0.0
        %777 = vmatprep.subr.mxu0 0.0
        %778 = vmatpush1.msra.mxu0 0.0
        %779 = vmatprep.subr.mxu0 0.0
        %780 = vmatpush1.msra.mxu0 0.0
        %781 = vmatprep.subr.mxu0 0.0
        %782 = vmatpush1.msra.mxu0 0.0
        %783 = vmatprep.subr.mxu0 0.0
        %784 = vmatpush1.msra.mxu0 0.0
        %785 = vmatprep.subr.mxu0 0.0
        %786 = vmatpush1.msra.mxu0 0.0
        %787 = vmatprep.mubr.f32.mxu0 0.0
        %788 = vmatmul.mubr.f32.gmra.mrb[0].mxu0 %v721
        %v789 = vpop.f32.mrb[0].mxu0
        %v790 = vadd.f32 0.0, %v789
        %v791 = vpop.f32.mrb[0].mxu0
        %792 = vdwg.mxu0
        %794 = vrot.lane.b32.xlu0 %v790, 120
        %v795 = vpop.permute.xlu0 %794
        %797 = vrot.lane.b32.xlu0 %v790, 112
        %v798 = vpop.permute.xlu0 %797
        %800 = vrot.lane.b32.xlu0 %v790, 104
        %v801 = vpop.permute.xlu0 %800
        %v803 = vcombine.low %v790, %v798
        %v804 = vcombine.high %v790, %v798
        %v806 = vunpack.c.l.s4 1983009808
        %v807 = vunpack.c.0.s8 %v806
        %v808 = vlaneseq
        %v809 = vshrl.u32 %v808, 7
        %v810 = vsub.s32 %v807, %v809
        %v811 = vrot.slane %v803, %v810
        %v813 = vunpack.c.l.s4 1983009808
        %v814 = vunpack.c.0.s8 %v813
        %v815 = vlaneseq
        %v816 = vshrl.u32 %v815, 7
        %v817 = vsub.s32 %v814, %v816
        %v818 = vrot.slane %v804, %v817
        %v819 = vcombine.low %v795, %v801
        %v820 = vcombine.high %v795, %v801
        %v822 = vunpack.c.l.s4 1983009808
        %v823 = vunpack.c.0.s8 %v822
        %v824 = vlaneseq
        %v825 = vshrl.u32 %v824, 7
        %v826 = vsub.s32 %v823, %v825
        %v827 = vrot.slane %v819, %v826
        %v829 = vunpack.c.l.s4 1983009808
        %v830 = vunpack.c.0.s8 %v829
        %v831 = vlaneseq
        %v832 = vshrl.u32 %v831, 7
        %v833 = vsub.s32 %v830, %v832
        %v834 = vrot.slane %v820, %v833
        %v835 = vcombine.low %v811, %v827
        %v836 = vcombine.high %v811, %v827
        %v838 = vunpack.c.l.s4 1934713408
        %v839 = vunpack.c.0.s8 %v838
        %v840 = vlaneseq
        %v841 = vshrl.u32 %v840, 7
        %v842 = vsub.s32 %v839, %v841
        %v843 = vrot.slane %v835, %v842
        %v845 = vunpack.c.l.s4 1934713408
        %v846 = vunpack.c.0.s8 %v845
        %v847 = vlaneseq
        %v848 = vshrl.u32 %v847, 7
        %v849 = vsub.s32 %v846, %v848
        %v850 = vrot.slane %v836, %v849
        %v851 = vcombine.low %v818, %v834
        %v852 = vcombine.high %v818, %v834
        %v854 = vunpack.c.l.s4 1934713408
        %v855 = vunpack.c.0.s8 %v854
        %v856 = vlaneseq
        %v857 = vshrl.u32 %v856, 7
        %v858 = vsub.s32 %v855, %v857
        %v859 = vrot.slane %v851, %v858
        %v861 = vunpack.c.l.s4 1934713408
        %v862 = vunpack.c.0.s8 %v861
        %v863 = vlaneseq
        %v864 = vshrl.u32 %v863, 7
        %v865 = vsub.s32 %v862, %v864
        %v866 = vrot.slane %v852, %v865
        %v867 = vcombine.high %v843, 0.0
        %v868 = vcombine.high %v850, 0.0
        %v869 = vcombine.high %v859, 0.0
        %v870 = vcombine.high %v866, 0.0
        %v871 = vcombine.low %v843, %v850
        %v873 = vunpack.c.l.s4 1983009808
        %v874 = vunpack.c.0.s8 %v873
        %v875 = vlaneseq
        %v876 = vshrl.u32 %v875, 7
        %v877 = vsub.s32 %v874, %v876
        %v878 = vrot.slane %v871, %v877
        %v879 = vcombine.low %v867, %v868
        %v881 = vunpack.c.l.s4 1983009808
        %v882 = vunpack.c.0.s8 %v881
        %v883 = vlaneseq
        %v884 = vshrl.u32 %v883, 7
        %v885 = vsub.s32 %v882, %v884
        %v886 = vrot.slane %v879, %v885
        %v887 = vcombine.low %v859, %v866
        %v889 = vunpack.c.l.s4 1983009808
        %v890 = vunpack.c.0.s8 %v889
        %v891 = vlaneseq
        %v892 = vshrl.u32 %v891, 7
        %v893 = vsub.s32 %v890, %v892
        %v894 = vrot.slane %v887, %v893
        %v895 = vcombine.low %v869, %v870
        %v897 = vunpack.c.l.s4 1983009808
        %v898 = vunpack.c.0.s8 %v897
        %v899 = vlaneseq
        %v900 = vshrl.u32 %v899, 7
        %v901 = vsub.s32 %v898, %v900
        %v902 = vrot.slane %v895, %v901
        %v903 = vcombine.low %v878, %v886
        %v904 = vcombine.high %v878, %v886
        %v906 = vunpack.c.l.s4 1934713408
        %v907 = vunpack.c.0.s8 %v906
        %v908 = vlaneseq
        %v909 = vshrl.u32 %v908, 7
        %v910 = vsub.s32 %v907, %v909
        %v911 = vrot.slane %v903, %v910
        %v913 = vunpack.c.l.s4 1934713408
        %v914 = vunpack.c.0.s8 %v913
        %v915 = vlaneseq
        %v916 = vshrl.u32 %v915, 7
        %v917 = vsub.s32 %v914, %v916
        %v918 = vrot.slane %v904, %v917
        %v919 = vcombine.low %v894, %v902
        %v920 = vcombine.high %v894, %v902
        %v922 = vunpack.c.l.s4 1934713408
        %v923 = vunpack.c.0.s8 %v922
        %v924 = vlaneseq
        %v925 = vshrl.u32 %v924, 7
        %v926 = vsub.s32 %v923, %v925
        %v927 = vrot.slane %v919, %v926
        %v929 = vunpack.c.l.s4 1934713408
        %v930 = vunpack.c.0.s8 %v929
        %v931 = vlaneseq
        %v932 = vshrl.u32 %v931, 7
        %v933 = vsub.s32 %v930, %v932
        %v934 = vrot.slane %v920, %v933
        %v935 = vcombine.low %v911, %v927
        %v936 = vcombine.high %v911, %v927
        %v937 = vcombine.low %v918, %v934
        %v938 = vcombine.high %v918, %v934
        %939 = vrot.lane.b32.xlu0 %v790, 96
        %v940 = vpop.permute.xlu0 %939
        %941 = vrot.lane.b32.xlu0 %v795, 96
        %v942 = vpop.permute.xlu0 %941
        %943 = vrot.lane.b32.xlu0 %v798, 96
        %v944 = vpop.permute.xlu0 %943
        %945 = vrot.lane.b32.xlu0 %v801, 96
        %v946 = vpop.permute.xlu0 %945
        %v951 = vcombine.low %v940, %v944
        %v952 = vcombine.high %v940, %v944
        %v954 = vunpack.c.l.s4 1983009808
        %v955 = vunpack.c.0.s8 %v954
        %v956 = vlaneseq
        %v957 = vshrl.u32 %v956, 7
        %v958 = vsub.s32 %v955, %v957
        %v959 = vrot.slane %v951, %v958
        %v961 = vunpack.c.l.s4 1983009808
        %v962 = vunpack.c.0.s8 %v961
        %v963 = vlaneseq
        %v964 = vshrl.u32 %v963, 7
        %v965 = vsub.s32 %v962, %v964
        %v966 = vrot.slane %v952, %v965
        %v967 = vcombine.low %v942, %v946
        %v968 = vcombine.high %v942, %v946
        %v970 = vunpack.c.l.s4 1983009808
        %v971 = vunpack.c.0.s8 %v970
        %v972 = vlaneseq
        %v973 = vshrl.u32 %v972, 7
        %v974 = vsub.s32 %v971, %v973
        %v975 = vrot.slane %v967, %v974
        %v977 = vunpack.c.l.s4 1983009808
        %v978 = vunpack.c.0.s8 %v977
        %v979 = vlaneseq
        %v980 = vshrl.u32 %v979, 7
        %v981 = vsub.s32 %v978, %v980
        %v982 = vrot.slane %v968, %v981
        %v983 = vcombine.low %v959, %v975
        %v984 = vcombine.high %v959, %v975
        %v986 = vunpack.c.l.s4 1934713408
        %v987 = vunpack.c.0.s8 %v986
        %v988 = vlaneseq
        %v989 = vshrl.u32 %v988, 7
        %v990 = vsub.s32 %v987, %v989
        %v991 = vrot.slane %v983, %v990
        %v993 = vunpack.c.l.s4 1934713408
        %v994 = vunpack.c.0.s8 %v993
        %v995 = vlaneseq
        %v996 = vshrl.u32 %v995, 7
        %v997 = vsub.s32 %v994, %v996
        %v998 = vrot.slane %v984, %v997
        %v999 = vcombine.low %v966, %v982
        %v1000 = vcombine.high %v966, %v982
        %v1002 = vunpack.c.l.s4 1934713408
        %v1003 = vunpack.c.0.s8 %v1002
        %v1004 = vlaneseq
        %v1005 = vshrl.u32 %v1004, 7
        %v1006 = vsub.s32 %v1003, %v1005
        %v1007 = vrot.slane %v999, %v1006
        %v1009 = vunpack.c.l.s4 1934713408
        %v1010 = vunpack.c.0.s8 %v1009
        %v1011 = vlaneseq
        %v1012 = vshrl.u32 %v1011, 7
        %v1013 = vsub.s32 %v1010, %v1012
        %v1014 = vrot.slane %v1000, %v1013
        %v1015 = vcombine.high %v991, 0.0
        %v1016 = vcombine.high %v998, 0.0
        %v1017 = vcombine.high %v1007, 0.0
        %v1018 = vcombine.high %v1014, 0.0
        %v1019 = vcombine.low %v991, %v998
        %v1021 = vunpack.c.l.s4 1983009808
        %v1022 = vunpack.c.0.s8 %v1021
        %v1023 = vlaneseq
        %v1024 = vshrl.u32 %v1023, 7
        %v1025 = vsub.s32 %v1022, %v1024
        %v1026 = vrot.slane %v1019, %v1025
        %v1027 = vcombine.low %v1015, %v1016
        %v1029 = vunpack.c.l.s4 1983009808
        %v1030 = vunpack.c.0.s8 %v1029
        %v1031 = vlaneseq
        %v1032 = vshrl.u32 %v1031, 7
        %v1033 = vsub.s32 %v1030, %v1032
        %v1034 = vrot.slane %v1027, %v1033
        %v1035 = vcombine.low %v1007, %v1014
        %v1037 = vunpack.c.l.s4 1983009808
        %v1038 = vunpack.c.0.s8 %v1037
        %v1039 = vlaneseq
        %v1040 = vshrl.u32 %v1039, 7
        %v1041 = vsub.s32 %v1038, %v1040
        %v1042 = vrot.slane %v1035, %v1041
        %v1043 = vcombine.low %v1017, %v1018
        %v1045 = vunpack.c.l.s4 1983009808
        %v1046 = vunpack.c.0.s8 %v1045
        %v1047 = vlaneseq
        %v1048 = vshrl.u32 %v1047, 7
        %v1049 = vsub.s32 %v1046, %v1048
        %v1050 = vrot.slane %v1043, %v1049
        %v1051 = vcombine.low %v1026, %v1034
        %v1052 = vcombine.high %v1026, %v1034
        %v1054 = vunpack.c.l.s4 1934713408
        %v1055 = vunpack.c.0.s8 %v1054
        %v1056 = vlaneseq
        %v1057 = vshrl.u32 %v1056, 7
        %v1058 = vsub.s32 %v1055, %v1057
        %v1059 = vrot.slane %v1051, %v1058
        %v1061 = vunpack.c.l.s4 1934713408
        %v1062 = vunpack.c.0.s8 %v1061
        %v1063 = vlaneseq
        %v1064 = vshrl.u32 %v1063, 7
        %v1065 = vsub.s32 %v1062, %v1064
        %v1066 = vrot.slane %v1052, %v1065
        %v1067 = vcombine.low %v1042, %v1050
        %v1068 = vcombine.high %v1042, %v1050
        %v1070 = vunpack.c.l.s4 1934713408
        %v1071 = vunpack.c.0.s8 %v1070
        %v1072 = vlaneseq
        %v1073 = vshrl.u32 %v1072, 7
        %v1074 = vsub.s32 %v1071, %v1073
        %v1075 = vrot.slane %v1067, %v1074
        %v1077 = vunpack.c.l.s4 1934713408
        %v1078 = vunpack.c.0.s8 %v1077
        %v1079 = vlaneseq
        %v1080 = vshrl.u32 %v1079, 7
        %v1081 = vsub.s32 %v1078, %v1080
        %v1082 = vrot.slane %v1068, %v1081
        %v1083 = vcombine.low %v1059, %v1075
        %v1084 = vcombine.high %v1059, %v1075
        %v1085 = vcombine.low %v1066, %v1082
        %v1086 = vcombine.high %v1066, %v1082
        %1087 = vrot.lane.b32.xlu0 %v790, 64
        %v1088 = vpop.permute.xlu0 %1087
        %1089 = vrot.lane.b32.xlu0 %v795, 64
        %v1090 = vpop.permute.xlu0 %1089
        %1091 = vrot.lane.b32.xlu0 %v798, 64
        %v1092 = vpop.permute.xlu0 %1091
        %1093 = vrot.lane.b32.xlu0 %v801, 64
        %v1094 = vpop.permute.xlu0 %1093
        %v1099 = vcombine.low %v1088, %v1092
        %v1100 = vcombine.high %v1088, %v1092
        %v1102 = vunpack.c.l.s4 1983009808
        %v1103 = vunpack.c.0.s8 %v1102
        %v1104 = vlaneseq
        %v1105 = vshrl.u32 %v1104, 7
        %v1106 = vsub.s32 %v1103, %v1105
        %v1107 = vrot.slane %v1099, %v1106
        %v1109 = vunpack.c.l.s4 1983009808
        %v1110 = vunpack.c.0.s8 %v1109
        %v1111 = vlaneseq
        %v1112 = vshrl.u32 %v1111, 7
        %v1113 = vsub.s32 %v1110, %v1112
        %v1114 = vrot.slane %v1100, %v1113
        %v1115 = vcombine.low %v1090, %v1094
        %v1116 = vcombine.high %v1090, %v1094
        %v1118 = vunpack.c.l.s4 1983009808
        %v1119 = vunpack.c.0.s8 %v1118
        %v1120 = vlaneseq
        %v1121 = vshrl.u32 %v1120, 7
        %v1122 = vsub.s32 %v1119, %v1121
        %v1123 = vrot.slane %v1115, %v1122
        %v1125 = vunpack.c.l.s4 1983009808
        %v1126 = vunpack.c.0.s8 %v1125
        %v1127 = vlaneseq
        %v1128 = vshrl.u32 %v1127, 7
        %v1129 = vsub.s32 %v1126, %v1128
        %v1130 = vrot.slane %v1116, %v1129
        %v1131 = vcombine.low %v1107, %v1123
        %v1132 = vcombine.high %v1107, %v1123
        %v1134 = vunpack.c.l.s4 1934713408
        %v1135 = vunpack.c.0.s8 %v1134
        %v1136 = vlaneseq
        %v1137 = vshrl.u32 %v1136, 7
        %v1138 = vsub.s32 %v1135, %v1137
        %v1139 = vrot.slane %v1131, %v1138
        %v1141 = vunpack.c.l.s4 1934713408
        %v1142 = vunpack.c.0.s8 %v1141
        %v1143 = vlaneseq
        %v1144 = vshrl.u32 %v1143, 7
        %v1145 = vsub.s32 %v1142, %v1144
        %v1146 = vrot.slane %v1132, %v1145
        %v1147 = vcombine.low %v1114, %v1130
        %v1148 = vcombine.high %v1114, %v1130
        %v1150 = vunpack.c.l.s4 1934713408
        %v1151 = vunpack.c.0.s8 %v1150
        %v1152 = vlaneseq
        %v1153 = vshrl.u32 %v1152, 7
        %v1154 = vsub.s32 %v1151, %v1153
        %v1155 = vrot.slane %v1147, %v1154
        %v1157 = vunpack.c.l.s4 1934713408
        %v1158 = vunpack.c.0.s8 %v1157
        %v1159 = vlaneseq
        %v1160 = vshrl.u32 %v1159, 7
        %v1161 = vsub.s32 %v1158, %v1160
        %v1162 = vrot.slane %v1148, %v1161
        %v1163 = vcombine.high %v1139, 0.0
        %v1164 = vcombine.high %v1146, 0.0
        %v1165 = vcombine.high %v1155, 0.0
        %v1166 = vcombine.high %v1162, 0.0
        %v1167 = vcombine.low %v1139, %v1146
        %v1169 = vunpack.c.l.s4 1983009808
        %v1170 = vunpack.c.0.s8 %v1169
        %v1171 = vlaneseq
        %v1172 = vshrl.u32 %v1171, 7
        %v1173 = vsub.s32 %v1170, %v1172
        %v1174 = vrot.slane %v1167, %v1173
        %v1175 = vcombine.low %v1163, %v1164
        %v1177 = vunpack.c.l.s4 1983009808
        %v1178 = vunpack.c.0.s8 %v1177
        %v1179 = vlaneseq
        %v1180 = vshrl.u32 %v1179, 7
        %v1181 = vsub.s32 %v1178, %v1180
        %v1182 = vrot.slane %v1175, %v1181
        %v1183 = vcombine.low %v1155, %v1162
        %v1185 = vunpack.c.l.s4 1983009808
        %v1186 = vunpack.c.0.s8 %v1185
        %v1187 = vlaneseq
        %v1188 = vshrl.u32 %v1187, 7
        %v1189 = vsub.s32 %v1186, %v1188
        %v1190 = vrot.slane %v1183, %v1189
        %v1191 = vcombine.low %v1165, %v1166
        %v1193 = vunpack.c.l.s4 1983009808
        %v1194 = vunpack.c.0.s8 %v1193
        %v1195 = vlaneseq
        %v1196 = vshrl.u32 %v1195, 7
        %v1197 = vsub.s32 %v1194, %v1196
        %v1198 = vrot.slane %v1191, %v1197
        %v1199 = vcombine.low %v1174, %v1182
        %v1200 = vcombine.high %v1174, %v1182
        %v1202 = vunpack.c.l.s4 1934713408
        %v1203 = vunpack.c.0.s8 %v1202
        %v1204 = vlaneseq
        %v1205 = vshrl.u32 %v1204, 7
        %v1206 = vsub.s32 %v1203, %v1205
        %v1207 = vrot.slane %v1199, %v1206
        %v1209 = vunpack.c.l.s4 1934713408
        %v1210 = vunpack.c.0.s8 %v1209
        %v1211 = vlaneseq
        %v1212 = vshrl.u32 %v1211, 7
        %v1213 = vsub.s32 %v1210, %v1212
        %v1214 = vrot.slane %v1200, %v1213
        %v1215 = vcombine.low %v1190, %v1198
        %v1216 = vcombine.high %v1190, %v1198
        %v1218 = vunpack.c.l.s4 1934713408
        %v1219 = vunpack.c.0.s8 %v1218
        %v1220 = vlaneseq
        %v1221 = vshrl.u32 %v1220, 7
        %v1222 = vsub.s32 %v1219, %v1221
        %v1223 = vrot.slane %v1215, %v1222
        %v1225 = vunpack.c.l.s4 1934713408
        %v1226 = vunpack.c.0.s8 %v1225
        %v1227 = vlaneseq
        %v1228 = vshrl.u32 %v1227, 7
        %v1229 = vsub.s32 %v1226, %v1228
        %v1230 = vrot.slane %v1216, %v1229
        %v1231 = vcombine.low %v1207, %v1223
        %v1232 = vcombine.high %v1207, %v1223
        %v1233 = vcombine.low %v1214, %v1230
        %v1234 = vcombine.high %v1214, %v1230
        %vm1235 = vcmask 64512
        %v1237 = vsel %vm1235, %v935, 0
        %v1240 = vsel %vm1235, %v1083, 0
        %1242 = vmatprep.subr.mxu0 0.0
        %1243 = vmatpush1.xpose.msra.mxu0 %v1240
        %1244 = vmatprep.subr.mxu0 0.0
        %1245 = vmatpush1.xpose.msra.mxu0 0.0
        %1246 = vmatprep.subr.mxu0 0.0
        %1247 = vmatpush1.xpose.msra.mxu0 0.0
        %1248 = vmatprep.subr.mxu0 0.0
        %1249 = vmatpush1.xpose.msra.mxu0 0.0
        %1250 = vmatprep.subr.mxu0 0.0
        %1251 = vmatpush1.xpose.msra.mxu0 0.0
        %1252 = vmatprep.subr.mxu0 0.0
        %1253 = vmatpush1.xpose.msra.mxu0 0.0
        %1254 = vmatprep.subr.mxu0 0.0
        %1255 = vmatpush1.xpose.msra.mxu0 0.0
        %1256 = vmatprep.subr.mxu0 0.0
        %1257 = vmatpush1.xpose.msra.mxu0 0.0
        %1258 = vmatprep.subr.mxu0 0.0
        %1259 = vmatpush1.xpose.msra.mxu0 0.0
        %1260 = vmatprep.subr.mxu0 0.0
        %1261 = vmatpush1.xpose.msra.mxu0 0.0
        %1262 = vmatprep.subr.mxu0 0.0
        %1263 = vmatpush1.xpose.msra.mxu0 0.0
        %1264 = vmatprep.subr.mxu0 0.0
        %1265 = vmatpush1.xpose.msra.mxu0 0.0
        %1266 = vmatprep.subr.mxu0 0.0
        %1267 = vmatpush1.xpose.msra.mxu0 0.0
        %1268 = vmatprep.subr.mxu0 0.0
        %1269 = vmatpush1.xpose.msra.mxu0 0.0
        %1270 = vmatprep.subr.mxu0 0.0
        %1271 = vmatpush1.xpose.msra.mxu0 0.0
        %1272 = vmatprep.subr.mxu0 0.0
        %1273 = vmatpush1.xpose.msra.mxu0 0.0
        %1274 = vmatprep.subr.mxu0 0.0
        %1275 = vmatpush1.xpose.msra.mxu0 0.0
        %1276 = vmatprep.subr.mxu0 0.0
        %1277 = vmatpush1.xpose.msra.mxu0 0.0
        %1278 = vmatprep.subr.mxu0 0.0
        %1279 = vmatpush1.xpose.msra.mxu0 0.0
        %1280 = vmatprep.subr.mxu0 0.0
        %1281 = vmatpush1.xpose.msra.mxu0 0.0
        %1282 = vmatprep.subr.mxu0 0.0
        %1283 = vmatpush1.xpose.msra.mxu0 0.0
        %1284 = vmatprep.subr.mxu0 0.0
        %1285 = vmatpush1.xpose.msra.mxu0 0.0
        %1286 = vmatprep.subr.mxu0 0.0
        %1287 = vmatpush1.xpose.msra.mxu0 0.0
        %1288 = vmatprep.subr.mxu0 0.0
        %1289 = vmatpush1.xpose.msra.mxu0 0.0
        %1290 = vmatprep.subr.mxu0 0.0
        %1291 = vmatpush1.xpose.msra.mxu0 0.0
        %1292 = vmatprep.subr.mxu0 0.0
        %1293 = vmatpush1.xpose.msra.mxu0 0.0
        %1294 = vmatprep.subr.mxu0 0.0
        %1295 = vmatpush1.xpose.msra.mxu0 0.0
        %1296 = vmatprep.subr.mxu0 0.0
        %1297 = vmatpush1.xpose.msra.mxu0 0.0
        %1298 = vmatprep.subr.mxu0 0.0
        %1299 = vmatpush1.xpose.msra.mxu0 0.0
        %1300 = vmatprep.subr.mxu0 0.0
        %1301 = vmatpush1.xpose.msra.mxu0 0.0
        %1302 = vmatprep.subr.mxu0 0.0
        %1303 = vmatpush1.xpose.msra.mxu0 0.0
        %1304 = vmatprep.subr.mxu0 0.0
        %1305 = vmatpush1.xpose.msra.mxu0 0.0
        %1306 = vmatprep.mubr.f32.mxu0 0.0
        %1307 = vmatmul.mubr.f32.gmra.mrb[0].mxu0 %v1237
        %v1308 = vpop.f32.mrb[0].mxu0
        %v1309 = vadd.f32 0.0, %v1308
        %v1310 = vpop.f32.mrb[0].mxu0
        %1311 = vdwg.mxu0
        %v1313 = vsel %vm1235, %v936, 0
        %v1316 = vsel %vm1235, %v1084, 0
        %1318 = vmatprep.subr.mxu0 0.0
        %1319 = vmatpush1.xpose.msra.mxu0 %v1316
        %1320 = vmatprep.subr.mxu0 0.0
        %1321 = vmatpush1.xpose.msra.mxu0 0.0
        %1322 = vmatprep.subr.mxu0 0.0
        %1323 = vmatpush1.xpose.msra.mxu0 0.0
        %1324 = vmatprep.subr.mxu0 0.0
        %1325 = vmatpush1.xpose.msra.mxu0 0.0
        %1326 = vmatprep.subr.mxu0 0.0
        %1327 = vmatpush1.xpose.msra.mxu0 0.0
        %1328 = vmatprep.subr.mxu0 0.0
        %1329 = vmatpush1.xpose.msra.mxu0 0.0
        %1330 = vmatprep.subr.mxu0 0.0
        %1331 = vmatpush1.xpose.msra.mxu0 0.0
        %1332 = vmatprep.subr.mxu0 0.0
        %1333 = vmatpush1.xpose.msra.mxu0 0.0
        %1334 = vmatprep.subr.mxu0 0.0
        %1335 = vmatpush1.xpose.msra.mxu0 0.0
        %1336 = vmatprep.subr.mxu0 0.0
        %1337 = vmatpush1.xpose.msra.mxu0 0.0
        %1338 = vmatprep.subr.mxu0 0.0
        %1339 = vmatpush1.xpose.msra.mxu0 0.0
        %1340 = vmatprep.subr.mxu0 0.0
        %1341 = vmatpush1.xpose.msra.mxu0 0.0
        %1342 = vmatprep.subr.mxu0 0.0
        %1343 = vmatpush1.xpose.msra.mxu0 0.0
        %1344 = vmatprep.subr.mxu0 0.0
        %1345 = vmatpush1.xpose.msra.mxu0 0.0
        %1346 = vmatprep.subr.mxu0 0.0
        %1347 = vmatpush1.xpose.msra.mxu0 0.0
        %1348 = vmatprep.subr.mxu0 0.0
        %1349 = vmatpush1.xpose.msra.mxu0 0.0
        %1350 = vmatprep.subr.mxu0 0.0
        %1351 = vmatpush1.xpose.msra.mxu0 0.0
        %1352 = vmatprep.subr.mxu0 0.0
        %1353 = vmatpush1.xpose.msra.mxu0 0.0
        %1354 = vmatprep.subr.mxu0 0.0
        %1355 = vmatpush1.xpose.msra.mxu0 0.0
        %1356 = vmatprep.subr.mxu0 0.0
        %1357 = vmatpush1.xpose.msra.mxu0 0.0
        %1358 = vmatprep.subr.mxu0 0.0
        %1359 = vmatpush1.xpose.msra.mxu0 0.0
        %1360 = vmatprep.subr.mxu0 0.0
        %1361 = vmatpush1.xpose.msra.mxu0 0.0
        %1362 = vmatprep.subr.mxu0 0.0
        %1363 = vmatpush1.xpose.msra.mxu0 0.0
        %1364 = vmatprep.subr.mxu0 0.0
        %1365 = vmatpush1.xpose.msra.mxu0 0.0
        %1366 = vmatprep.subr.mxu0 0.0
        %1367 = vmatpush1.xpose.msra.mxu0 0.0
        %1368 = vmatprep.subr.mxu0 0.0
        %1369 = vmatpush1.xpose.msra.mxu0 0.0
        %1370 = vmatprep.subr.mxu0 0.0
        %1371 = vmatpush1.xpose.msra.mxu0 0.0
        %1372 = vmatprep.subr.mxu0 0.0
        %1373 = vmatpush1.xpose.msra.mxu0 0.0
        %1374 = vmatprep.subr.mxu0 0.0
        %1375 = vmatpush1.xpose.msra.mxu0 0.0
        %1376 = vmatprep.subr.mxu0 0.0
        %1377 = vmatpush1.xpose.msra.mxu0 0.0
        %1378 = vmatprep.subr.mxu0 0.0
        %1379 = vmatpush1.xpose.msra.mxu0 0.0
        %1380 = vmatprep.subr.mxu0 0.0
        %1381 = vmatpush1.xpose.msra.mxu0 0.0
        %1382 = vmatprep.mubr.f32.mxu0 0.0
        %1383 = vmatmul.mubr.f32.gmra.mrb[0].mxu0 %v1313
        %v1384 = vpop.f32.mrb[0].mxu0
        %v1385 = vadd.f32 0.0, %v1384
        %v1386 = vpop.f32.mrb[0].mxu0
        %1387 = vdwg.mxu0
        %v1389 = vsel %vm1235, %v937, 0
        %v1392 = vsel %vm1235, %v1085, 0
        %1394 = vmatprep.subr.mxu0 0.0
        %1395 = vmatpush1.xpose.msra.mxu0 %v1392
        %1396 = vmatprep.subr.mxu0 0.0
        %1397 = vmatpush1.xpose.msra.mxu0 0.0
        %1398 = vmatprep.subr.mxu0 0.0
        %1399 = vmatpush1.xpose.msra.mxu0 0.0
        %1400 = vmatprep.subr.mxu0 0.0
        %1401 = vmatpush1.xpose.msra.mxu0 0.0
        %1402 = vmatprep.subr.mxu0 0.0
        %1403 = vmatpush1.xpose.msra.mxu0 0.0
        %1404 = vmatprep.subr.mxu0 0.0
        %1405 = vmatpush1.xpose.msra.mxu0 0.0
        %1406 = vmatprep.subr.mxu0 0.0
        %1407 = vmatpush1.xpose.msra.mxu0 0.0
        %1408 = vmatprep.subr.mxu0 0.0
        %1409 = vmatpush1.xpose.msra.mxu0 0.0
        %1410 = vmatprep.subr.mxu0 0.0
        %1411 = vmatpush1.xpose.msra.mxu0 0.0
        %1412 = vmatprep.subr.mxu0 0.0
        %1413 = vmatpush1.xpose.msra.mxu0 0.0
        %1414 = vmatprep.subr.mxu0 0.0
        %1415 = vmatpush1.xpose.msra.mxu0 0.0
        %1416 = vmatprep.subr.mxu0 0.0
        %1417 = vmatpush1.xpose.msra.mxu0 0.0
        %1418 = vmatprep.subr.mxu0 0.0
        %1419 = vmatpush1.xpose.msra.mxu0 0.0
        %1420 = vmatprep.subr.mxu0 0.0
        %1421 = vmatpush1.xpose.msra.mxu0 0.0
        %1422 = vmatprep.subr.mxu0 0.0
        %1423 = vmatpush1.xpose.msra.mxu0 0.0
        %1424 = vmatprep.subr.mxu0 0.0
        %1425 = vmatpush1.xpose.msra.mxu0 0.0
        %1426 = vmatprep.subr.mxu0 0.0
        %1427 = vmatpush1.xpose.msra.mxu0 0.0
        %1428 = vmatprep.subr.mxu0 0.0
        %1429 = vmatpush1.xpose.msra.mxu0 0.0
        %1430 = vmatprep.subr.mxu0 0.0
        %1431 = vmatpush1.xpose.msra.mxu0 0.0
        %1432 = vmatprep.subr.mxu0 0.0
        %1433 = vmatpush1.xpose.msra.mxu0 0.0
        %1434 = vmatprep.subr.mxu0 0.0
        %1435 = vmatpush1.xpose.msra.mxu0 0.0
        %1436 = vmatprep.subr.mxu0 0.0
        %1437 = vmatpush1.xpose.msra.mxu0 0.0
        %1438 = vmatprep.subr.mxu0 0.0
        %1439 = vmatpush1.xpose.msra.mxu0 0.0
        %1440 = vmatprep.subr.mxu0 0.0
        %1441 = vmatpush1.xpose.msra.mxu0 0.0
        %1442 = vmatprep.subr.mxu0 0.0
        %1443 = vmatpush1.xpose.msra.mxu0 0.0
        %1444 = vmatprep.subr.mxu0 0.0
        %1445 = vmatpush1.xpose.msra.mxu0 0.0
        %1446 = vmatprep.subr.mxu0 0.0
        %1447 = vmatpush1.xpose.msra.mxu0 0.0
        %1448 = vmatprep.subr.mxu0 0.0
        %1449 = vmatpush1.xpose.msra.mxu0 0.0
        %1450 = vmatprep.subr.mxu0 0.0
        %1451 = vmatpush1.xpose.msra.mxu0 0.0
        %1452 = vmatprep.subr.mxu0 0.0
        %1453 = vmatpush1.xpose.msra.mxu0 0.0
        %1454 = vmatprep.subr.mxu0 0.0
        %1455 = vmatpush1.xpose.msra.mxu0 0.0
        %1456 = vmatprep.subr.mxu0 0.0
        %1457 = vmatpush1.xpose.msra.mxu0 0.0
        %1458 = vmatprep.mubr.f32.mxu0 0.0
        %1459 = vmatmul.mubr.f32.gmra.mrb[0].mxu0 %v1389
        %v1460 = vpop.f32.mrb[0].mxu0
        %v1461 = vadd.f32 0.0, %v1460
        %v1462 = vpop.f32.mrb[0].mxu0
        %1463 = vdwg.mxu0
        %v1465 = vsel %vm1235, %v938, 0
        %v1468 = vsel %vm1235, %v1086, 0
        %1470 = vmatprep.subr.mxu0 0.0
        %1471 = vmatpush1.xpose.msra.mxu0 %v1468
        %1472 = vmatprep.subr.mxu0 0.0
        %1473 = vmatpush1.xpose.msra.mxu0 0.0
        %1474 = vmatprep.subr.mxu0 0.0
        %1475 = vmatpush1.xpose.msra.mxu0 0.0
        %1476 = vmatprep.subr.mxu0 0.0
        %1477 = vmatpush1.xpose.msra.mxu0 0.0
        %1478 = vmatprep.subr.mxu0 0.0
        %1479 = vmatpush1.xpose.msra.mxu0 0.0
        %1480 = vmatprep.subr.mxu0 0.0
        %1481 = vmatpush1.xpose.msra.mxu0 0.0
        %1482 = vmatprep.subr.mxu0 0.0
        %1483 = vmatpush1.xpose.msra.mxu0 0.0
        %1484 = vmatprep.subr.mxu0 0.0
        %1485 = vmatpush1.xpose.msra.mxu0 0.0
        %1486 = vmatprep.subr.mxu0 0.0
        %1487 = vmatpush1.xpose.msra.mxu0 0.0
        %1488 = vmatprep.subr.mxu0 0.0
        %1489 = vmatpush1.xpose.msra.mxu0 0.0
        %1490 = vmatprep.subr.mxu0 0.0
        %1491 = vmatpush1.xpose.msra.mxu0 0.0
        %1492 = vmatprep.subr.mxu0 0.0
        %1493 = vmatpush1.xpose.msra.mxu0 0.0
        %1494 = vmatprep.subr.mxu0 0.0
        %1495 = vmatpush1.xpose.msra.mxu0 0.0
        %1496 = vmatprep.subr.mxu0 0.0
        %1497 = vmatpush1.xpose.msra.mxu0 0.0
        %1498 = vmatprep.subr.mxu0 0.0
        %1499 = vmatpush1.xpose.msra.mxu0 0.0
        %1500 = vmatprep.subr.mxu0 0.0
        %1501 = vmatpush1.xpose.msra.mxu0 0.0
        %1502 = vmatprep.subr.mxu0 0.0
        %1503 = vmatpush1.xpose.msra.mxu0 0.0
        %1504 = vmatprep.subr.mxu0 0.0
        %1505 = vmatpush1.xpose.msra.mxu0 0.0
        %1506 = vmatprep.subr.mxu0 0.0
        %1507 = vmatpush1.xpose.msra.mxu0 0.0
        %1508 = vmatprep.subr.mxu0 0.0
        %1509 = vmatpush1.xpose.msra.mxu0 0.0
        %1510 = vmatprep.subr.mxu0 0.0
        %1511 = vmatpush1.xpose.msra.mxu0 0.0
        %1512 = vmatprep.subr.mxu0 0.0
        %1513 = vmatpush1.xpose.msra.mxu0 0.0
        %1514 = vmatprep.subr.mxu0 0.0
        %1515 = vmatpush1.xpose.msra.mxu0 0.0
        %1516 = vmatprep.subr.mxu0 0.0
        %1517 = vmatpush1.xpose.msra.mxu0 0.0
        %1518 = vmatprep.subr.mxu0 0.0
        %1519 = vmatpush1.xpose.msra.mxu0 0.0
        %1520 = vmatprep.subr.mxu0 0.0
        %1521 = vmatpush1.xpose.msra.mxu0 0.0
        %1522 = vmatprep.subr.mxu0 0.0
        %1523 = vmatpush1.xpose.msra.mxu0 0.0
        %1524 = vmatprep.subr.mxu0 0.0
        %1525 = vmatpush1.xpose.msra.mxu0 0.0
        %1526 = vmatprep.subr.mxu0 0.0
        %1527 = vmatpush1.xpose.msra.mxu0 0.0
        %1528 = vmatprep.subr.mxu0 0.0
        %1529 = vmatpush1.xpose.msra.mxu0 0.0
        %1530 = vmatprep.subr.mxu0 0.0
        %1531 = vmatpush1.xpose.msra.mxu0 0.0
        %1532 = vmatprep.subr.mxu0 0.0
        %1533 = vmatpush1.xpose.msra.mxu0 0.0
        %1534 = vmatprep.mubr.f32.mxu0 0.0
        %1535 = vmatmul.mubr.f32.gmra.mrb[0].mxu0 %v1465
        %v1536 = vpop.f32.mrb[0].mxu0
        %v1537 = vadd.f32 0.0, %v1536
        %v1538 = vpop.f32.mrb[0].mxu0
        %1539 = vdwg.mxu0
        %v1540 = vmul.f32 %v1309, 0.35355338
        %v1541 = vmul.f32 %v1385, 0.35355338
        %v1542 = vmul.f32 %v1461, 0.35355338
        %v1543 = vmul.f32 %v1537, 0.35355338
        %v1544 = vsel %vm1235, %v1540, -inf
        %1545 = vmax.xlane.f32.xlu0 %v1544
        %v1546 = vpop.xlane.xlu0 %1545
        %v1547 = vsel %vm1235, %v1541, -inf
        %1548 = vmax.xlane.f32.xlu0 %v1547
        %v1549 = vpop.xlane.xlu0 %1548
        %v1550 = vsel %vm1235, %v1542, -inf
        %1551 = vmax.xlane.f32.xlu0 %v1550
        %v1552 = vpop.xlane.xlu0 %1551
        %v1553 = vsel %vm1235, %v1543, -inf
        %1554 = vmax.xlane.f32.xlu0 %v1553
        %v1555 = vpop.xlane.xlu0 %1554
        %v1556 = vsub.f32 %v1540, %v1546
        %v1557 = vsub.f32 %v1541, %v1549
        %v1558 = vsub.f32 %v1542, %v1552
        %v1559 = vsub.f32 %v1543, %v1555
        %v1560 = vmul.f32 %v1556, 1.442695
        %v1561 = vpow.pop %v1560
        %v1562 = vmul.f32 %v1557, 1.442695
        %v1563 = vpow.pop %v1562
        %v1564 = vmul.f32 %v1558, 1.442695
        %v1565 = vpow.pop %v1564
        %v1566 = vmul.f32 %v1559, 1.442695
        %v1567 = vpow.pop %v1566
        %v1568 = vsel %vm1235, %v1561, 0.0
        %1569 = vadd.xlane.f32.xlu0 %v1568
        %v1570 = vpop.xlane.xlu0 %1569
        %v1571 = vsel %vm1235, %v1563, 0.0
        %1572 = vadd.xlane.f32.xlu0 %v1571
        %v1573 = vpop.xlane.xlu0 %1572
        %v1574 = vsel %vm1235, %v1565, 0.0
        %1575 = vadd.xlane.f32.xlu0 %v1574
        %v1576 = vpop.xlane.xlu0 %1575
        %v1577 = vsel %vm1235, %v1567, 0.0
        %1578 = vadd.xlane.f32.xlu0 %v1577
        %v1579 = vpop.xlane.xlu0 %1578
        %v1580 = vrcp.pop %v1570
        %v1581 = vmul.f32 %v1561, %v1580
        %v1582 = vrcp.pop %v1573
        %v1583 = vmul.f32 %v1563, %v1582
        %v1584 = vrcp.pop %v1576
        %v1585 = vmul.f32 %v1565, %v1584
        %v1586 = vrcp.pop %v1579
        %v1587 = vmul.f32 %v1567, %v1586
        %1588 = vst.msk [vmem:[%s674] sm:$0xff] %vm1235, %v1581
        %1589 = vst.msk [vmem:[%s674 + $0x8] sm:$0xff] %vm1235, %v1583
        %1590 = vst.msk [vmem:[%s674 + $0x10] sm:$0xff] %vm1235, %v1585
        %1591 = vst.msk [vmem:[%s674 + $0x18] sm:$0xff] %vm1235, %v1587
        %v1593 = vsel %vm1235, %v1581, 0
        %1595 = vmatprep.subr.mxu0 0.0
        %1596 = vmatpush1.msra.mxu0 %v1231
        %1597 = vmatprep.subr.mxu0 0.0
        %1598 = vmatpush1.msra.mxu0 0.0
        %1599 = vmatprep.subr.mxu0 0.0
        %1600 = vmatpush1.msra.mxu0 0.0
        %1601 = vmatprep.subr.mxu0 0.0
        %1602 = vmatpush1.msra.mxu0 0.0
        %1603 = vmatprep.subr.mxu0 0.0
        %1604 = vmatpush1.msra.mxu0 0.0
        %1605 = vmatprep.subr.mxu0 0.0
        %1606 = vmatpush1.msra.mxu0 0.0
        %1607 = vmatprep.subr.mxu0 0.0
        %1608 = vmatpush1.msra.mxu0 0.0
        %1609 = vmatprep.subr.mxu0 0.0
        %1610 = vmatpush1.msra.mxu0 0.0
        %1611 = vmatprep.subr.mxu0 0.0
        %1612 = vmatpush1.msra.mxu0 0.0
        %1613 = vmatprep.subr.mxu0 0.0
        %1614 = vmatpush1.msra.mxu0 0.0
        %1615 = vmatprep.subr.mxu0 0.0
        %1616 = vmatpush1.msra.mxu0 0.0
        %1617 = vmatprep.subr.mxu0 0.0
        %1618 = vmatpush1.msra.mxu0 0.0
        %1619 = vmatprep.subr.mxu0 0.0
        %1620 = vmatpush1.msra.mxu0 0.0
        %1621 = vmatprep.subr.mxu0 0.0
        %1622 = vmatpush1.msra.mxu0 0.0
        %1623 = vmatprep.subr.mxu0 0.0
        %1624 = vmatpush1.msra.mxu0 0.0
        %1625 = vmatprep.subr.mxu0 0.0
        %1626 = vmatpush1.msra.mxu0 0.0
        %1627 = vmatprep.subr.mxu0 0.0
        %1628 = vmatpush1.msra.mxu0 0.0
        %1629 = vmatprep.subr.mxu0 0.0
        %1630 = vmatpush1.msra.mxu0 0.0
        %1631 = vmatprep.subr.mxu0 0.0
        %1632 = vmatpush1.msra.mxu0 0.0
        %1633 = vmatprep.subr.mxu0 0.0
        %1634 = vmatpush1.msra.mxu0 0.0
        %1635 = vmatprep.subr.mxu0 0.0
        %1636 = vmatpush1.msra.mxu0 0.0
        %1637 = vmatprep.subr.mxu0 0.0
        %1638 = vmatpush1.msra.mxu0 0.0
        %1639 = vmatprep.subr.mxu0 0.0
        %1640 = vmatpush1.msra.mxu0 0.0
        %1641 = vmatprep.subr.mxu0 0.0
        %1642 = vmatpush1.msra.mxu0 0.0
        %1643 = vmatprep.subr.mxu0 0.0
        %1644 = vmatpush1.msra.mxu0 0.0
        %1645 = vmatprep.subr.mxu0 0.0
        %1646 = vmatpush1.msra.mxu0 0.0
        %1647 = vmatprep.subr.mxu0 0.0
        %1648 = vmatpush1.msra.mxu0 0.0
        %1649 = vmatprep.subr.mxu0 0.0
        %1650 = vmatpush1.msra.mxu0 0.0
        %1651 = vmatprep.subr.mxu0 0.0
        %1652 = vmatpush1.msra.mxu0 0.0
        %1653 = vmatprep.subr.mxu0 0.0
        %1654 = vmatpush1.msra.mxu0 0.0
        %1655 = vmatprep.subr.mxu0 0.0
        %1656 = vmatpush1.msra.mxu0 0.0
        %1657 = vmatprep.subr.mxu0 0.0
        %1658 = vmatpush1.msra.mxu0 0.0
        %1659 = vmatprep.mubr.f32.mxu0 0.0
        %1660 = vmatmul.mubr.f32.gmra.mrb[0].mxu0 %v1593
        %v1661 = vpop.f32.mrb[0].mxu0
        %v1662 = vadd.f32 0.0, %v1661
        %v1663 = vpop.f32.mrb[0].mxu0
        %1664 = vdwg.mxu0
        %v1666 = vsel %vm1235, %v1583, 0
        %1668 = vmatprep.subr.mxu0 0.0
        %1669 = vmatpush1.msra.mxu0 %v1232
        %1670 = vmatprep.subr.mxu0 0.0
        %1671 = vmatpush1.msra.mxu0 0.0
        %1672 = vmatprep.subr.mxu0 0.0
        %1673 = vmatpush1.msra.mxu0 0.0
        %1674 = vmatprep.subr.mxu0 0.0
        %1675 = vmatpush1.msra.mxu0 0.0
        %1676 = vmatprep.subr.mxu0 0.0
        %1677 = vmatpush1.msra.mxu0 0.0
        %1678 = vmatprep.subr.mxu0 0.0
        %1679 = vmatpush1.msra.mxu0 0.0
        %1680 = vmatprep.subr.mxu0 0.0
        %1681 = vmatpush1.msra.mxu0 0.0
        %1682 = vmatprep.subr.mxu0 0.0
        %1683 = vmatpush1.msra.mxu0 0.0
        %1684 = vmatprep.subr.mxu0 0.0
        %1685 = vmatpush1.msra.mxu0 0.0
        %1686 = vmatprep.subr.mxu0 0.0
        %1687 = vmatpush1.msra.mxu0 0.0
        %1688 = vmatprep.subr.mxu0 0.0
        %1689 = vmatpush1.msra.mxu0 0.0
        %1690 = vmatprep.subr.mxu0 0.0
        %1691 = vmatpush1.msra.mxu0 0.0
        %1692 = vmatprep.subr.mxu0 0.0
        %1693 = vmatpush1.msra.mxu0 0.0
        %1694 = vmatprep.subr.mxu0 0.0
        %1695 = vmatpush1.msra.mxu0 0.0
        %1696 = vmatprep.subr.mxu0 0.0
        %1697 = vmatpush1.msra.mxu0 0.0
        %1698 = vmatprep.subr.mxu0 0.0
        %1699 = vmatpush1.msra.mxu0 0.0
        %1700 = vmatprep.subr.mxu0 0.0
        %1701 = vmatpush1.msra.mxu0 0.0
        %1702 = vmatprep.subr.mxu0 0.0
        %1703 = vmatpush1.msra.mxu0 0.0
        %1704 = vmatprep.subr.mxu0 0.0
        %1705 = vmatpush1.msra.mxu0 0.0
        %1706 = vmatprep.subr.mxu0 0.0
        %1707 = vmatpush1.msra.mxu0 0.0
        %1708 = vmatprep.subr.mxu0 0.0
        %1709 = vmatpush1.msra.mxu0 0.0
        %1710 = vmatprep.subr.mxu0 0.0
        %1711 = vmatpush1.msra.mxu0 0.0
        %1712 = vmatprep.subr.mxu0 0.0
        %1713 = vmatpush1.msra.mxu0 0.0
        %1714 = vmatprep.subr.mxu0 0.0
        %1715 = vmatpush1.msra.mxu0 0.0
        %1716 = vmatprep.subr.mxu0 0.0
        %1717 = vmatpush1.msra.mxu0 0.0
        %1718 = vmatprep.subr.mxu0 0.0
        %1719 = vmatpush1.msra.mxu0 0.0
        %1720 = vmatprep.subr.mxu0 0.0
        %1721 = vmatpush1.msra.mxu0 0.0
        %1722 = vmatprep.subr.mxu0 0.0
        %1723 = vmatpush1.msra.mxu0 0.0
        %1724 = vmatprep.subr.mxu0 0.0
        %1725 = vmatpush1.msra.mxu0 0.0
        %1726 = vmatprep.subr.mxu0 0.0
        %1727 = vmatpush1.msra.mxu0 0.0
        %1728 = vmatprep.subr.mxu0 0.0
        %1729 = vmatpush1.msra.mxu0 0.0
        %1730 = vmatprep.subr.mxu0 0.0
        %1731 = vmatpush1.msra.mxu0 0.0
        %1732 = vmatprep.mubr.f32.mxu0 0.0
        %1733 = vmatmul.mubr.f32.gmra.mrb[0].mxu0 %v1666
        %v1734 = vpop.f32.mrb[0].mxu0
        %v1735 = vadd.f32 0.0, %v1734
        %v1736 = vpop.f32.mrb[0].mxu0
        %1737 = vdwg.mxu0
        %v1739 = vsel %vm1235, %v1585, 0
        %1741 = vmatprep.subr.mxu0 0.0
        %1742 = vmatpush1.msra.mxu0 %v1233
        %1743 = vmatprep.subr.mxu0 0.0
        %1744 = vmatpush1.msra.mxu0 0.0
        %1745 = vmatprep.subr.mxu0 0.0
        %1746 = vmatpush1.msra.mxu0 0.0
        %1747 = vmatprep.subr.mxu0 0.0
        %1748 = vmatpush1.msra.mxu0 0.0
        %1749 = vmatprep.subr.mxu0 0.0
        %1750 = vmatpush1.msra.mxu0 0.0
        %1751 = vmatprep.subr.mxu0 0.0
        %1752 = vmatpush1.msra.mxu0 0.0
        %1753 = vmatprep.subr.mxu0 0.0
        %1754 = vmatpush1.msra.mxu0 0.0
        %1755 = vmatprep.subr.mxu0 0.0
        %1756 = vmatpush1.msra.mxu0 0.0
        %1757 = vmatprep.subr.mxu0 0.0
        %1758 = vmatpush1.msra.mxu0 0.0
        %1759 = vmatprep.subr.mxu0 0.0
        %1760 = vmatpush1.msra.mxu0 0.0
        %1761 = vmatprep.subr.mxu0 0.0
        %1762 = vmatpush1.msra.mxu0 0.0
        %1763 = vmatprep.subr.mxu0 0.0
        %1764 = vmatpush1.msra.mxu0 0.0
        %1765 = vmatprep.subr.mxu0 0.0
        %1766 = vmatpush1.msra.mxu0 0.0
        %1767 = vmatprep.subr.mxu0 0.0
        %1768 = vmatpush1.msra.mxu0 0.0
        %1769 = vmatprep.subr.mxu0 0.0
        %1770 = vmatpush1.msra.mxu0 0.0
        %1771 = vmatprep.subr.mxu0 0.0
        %1772 = vmatpush1.msra.mxu0 0.0
        %1773 = vmatprep.subr.mxu0 0.0
        %1774 = vmatpush1.msra.mxu0 0.0
        %1775 = vmatprep.subr.mxu0 0.0
        %1776 = vmatpush1.msra.mxu0 0.0
        %1777 = vmatprep.subr.mxu0 0.0
        %1778 = vmatpush1.msra.mxu0 0.0
        %1779 = vmatprep.subr.mxu0 0.0
        %1780 = vmatpush1.msra.mxu0 0.0
        %1781 = vmatprep.subr.mxu0 0.0
        %1782 = vmatpush1.msra.mxu0 0.0
        %1783 = vmatprep.subr.mxu0 0.0
        %1784 = vmatpush1.msra.mxu0 0.0
        %1785 = vmatprep.subr.mxu0 0.0
        %1786 = vmatpush1.msra.mxu0 0.0
        %1787 = vmatprep.subr.mxu0 0.0
        %1788 = vmatpush1.msra.mxu0 0.0
        %1789 = vmatprep.subr.mxu0 0.0
        %1790 = vmatpush1.msra.mxu0 0.0
        %1791 = vmatprep.subr.mxu0 0.0
        %1792 = vmatpush1.msra.mxu0 0.0
        %1793 = vmatprep.subr.mxu0 0.0
        %1794 = vmatpush1.msra.mxu0 0.0
        %1795 = vmatprep.subr.mxu0 0.0
        %1796 = vmatpush1.msra.mxu0 0.0
        %1797 = vmatprep.subr.mxu0 0.0
        %1798 = vmatpush1.msra.mxu0 0.0
        %1799 = vmatprep.subr.mxu0 0.0
        %1800 = vmatpush1.msra.mxu0 0.0
        %1801 = vmatprep.subr.mxu0 0.0
        %1802 = vmatpush1.msra.mxu0 0.0
        %1803 = vmatprep.subr.mxu0 0.0
        %1804 = vmatpush1.msra.mxu0 0.0
        %1805 = vmatprep.mubr.f32.mxu0 0.0
        %1806 = vmatmul.mubr.f32.gmra.mrb[0].mxu0 %v1739
        %v1807 = vpop.f32.mrb[0].mxu0
        %v1808 = vadd.f32 0.0, %v1807
        %v1809 = vpop.f32.mrb[0].mxu0
        %1810 = vdwg.mxu0
        %v1812 = vsel %vm1235, %v1587, 0
        %1814 = vmatprep.subr.mxu0 0.0
        %1815 = vmatpush1.msra.mxu0 %v1234
        %1816 = vmatprep.subr.mxu0 0.0
        %1817 = vmatpush1.msra.mxu0 0.0
        %1818 = vmatprep.subr.mxu0 0.0
        %1819 = vmatpush1.msra.mxu0 0.0
        %1820 = vmatprep.subr.mxu0 0.0
        %1821 = vmatpush1.msra.mxu0 0.0
        %1822 = vmatprep.subr.mxu0 0.0
        %1823 = vmatpush1.msra.mxu0 0.0
        %1824 = vmatprep.subr.mxu0 0.0
        %1825 = vmatpush1.msra.mxu0 0.0
        %1826 = vmatprep.subr.mxu0 0.0
        %1827 = vmatpush1.msra.mxu0 0.0
        %1828 = vmatprep.subr.mxu0 0.0
        %1829 = vmatpush1.msra.mxu0 0.0
        %1830 = vmatprep.subr.mxu0 0.0
        %1831 = vmatpush1.msra.mxu0 0.0
        %1832 = vmatprep.subr.mxu0 0.0
        %1833 = vmatpush1.msra.mxu0 0.0
        %1834 = vmatprep.subr.mxu0 0.0
        %1835 = vmatpush1.msra.mxu0 0.0
        %1836 = vmatprep.subr.mxu0 0.0
        %1837 = vmatpush1.msra.mxu0 0.0
        %1838 = vmatprep.subr.mxu0 0.0
        %1839 = vmatpush1.msra.mxu0 0.0
        %1840 = vmatprep.subr.mxu0 0.0
        %1841 = vmatpush1.msra.mxu0 0.0
        %1842 = vmatprep.subr.mxu0 0.0
        %1843 = vmatpush1.msra.mxu0 0.0
        %1844 = vmatprep.subr.mxu0 0.0
        %1845 = vmatpush1.msra.mxu0 0.0
        %1846 = vmatprep.subr.mxu0 0.0
        %1847 = vmatpush1.msra.mxu0 0.0
        %1848 = vmatprep.subr.mxu0 0.0
        %1849 = vmatpush1.msra.mxu0 0.0
        %1850 = vmatprep.subr.mxu0 0.0
        %1851 = vmatpush1.msra.mxu0 0.0
        %1852 = vmatprep.subr.mxu0 0.0
        %1853 = vmatpush1.msra.mxu0 0.0
        %1854 = vmatprep.subr.mxu0 0.0
        %1855 = vmatpush1.msra.mxu0 0.0
        %1856 = vmatprep.subr.mxu0 0.0
        %1857 = vmatpush1.msra.mxu0 0.0
        %1858 = vmatprep.subr.mxu0 0.0
        %1859 = vmatpush1.msra.mxu0 0.0
        %1860 = vmatprep.subr.mxu0 0.0
        %1861 = vmatpush1.msra.mxu0 0.0
        %1862 = vmatprep.subr.mxu0 0.0
        %1863 = vmatpush1.msra.mxu0 0.0
        %1864 = vmatprep.subr.mxu0 0.0
        %1865 = vmatpush1.msra.mxu0 0.0
        %1866 = vmatprep.subr.mxu0 0.0
        %1867 = vmatpush1.msra.mxu0 0.0
        %1868 = vmatprep.subr.mxu0 0.0
        %1869 = vmatpush1.msra.mxu0 0.0
        %1870 = vmatprep.subr.mxu0 0.0
        %1871 = vmatpush1.msra.mxu0 0.0
        %1872 = vmatprep.subr.mxu0 0.0
        %1873 = vmatpush1.msra.mxu0 0.0
        %1874 = vmatprep.subr.mxu0 0.0
        %1875 = vmatpush1.msra.mxu0 0.0
        %1876 = vmatprep.subr.mxu0 0.0
        %1877 = vmatpush1.msra.mxu0 0.0
        %1878 = vmatprep.mubr.f32.mxu0 0.0
        %1879 = vmatmul.mubr.f32.gmra.mrb[0].mxu0 %v1812
        %v1880 = vpop.f32.mrb[0].mxu0
        %v1881 = vadd.f32 0.0, %v1880
        %v1882 = vpop.f32.mrb[0].mxu0
        %1883 = vdwg.mxu0
        %v1884 = vcombine.low %v1662, %v1808
        %v1885 = vcombine.high %v1662, %v1808
        %v1887 = vunpack.c.l.s4 1983009808
        %v1888 = vunpack.c.0.s8 %v1887
        %v1889 = vlaneseq
        %v1890 = vshrl.u32 %v1889, 7
        %v1891 = vsub.s32 %v1888, %v1890
        %v1892 = vrot.slane %v1884, %v1891
        %v1894 = vunpack.c.l.s4 1983009808
        %v1895 = vunpack.c.0.s8 %v1894
        %v1896 = vlaneseq
        %v1897 = vshrl.u32 %v1896, 7
        %v1898 = vsub.s32 %v1895, %v1897
        %v1899 = vrot.slane %v1885, %v1898
        %v1900 = vcombine.low %v1735, %v1881
        %v1901 = vcombine.high %v1735, %v1881
        %v1903 = vunpack.c.l.s4 1983009808
        %v1904 = vunpack.c.0.s8 %v1903
        %v1905 = vlaneseq
        %v1906 = vshrl.u32 %v1905, 7
        %v1907 = vsub.s32 %v1904, %v1906
        %v1908 = vrot.slane %v1900, %v1907
        %v1910 = vunpack.c.l.s4 1983009808
        %v1911 = vunpack.c.0.s8 %v1910
        %v1912 = vlaneseq
        %v1913 = vshrl.u32 %v1912, 7
        %v1914 = vsub.s32 %v1911, %v1913
        %v1915 = vrot.slane %v1901, %v1914
        %v1916 = vcombine.low %v1892, %v1908
        %v1917 = vcombine.high %v1892, %v1908
        %v1919 = vunpack.c.l.s4 1934713408
        %v1920 = vunpack.c.0.s8 %v1919
        %v1921 = vlaneseq
        %v1922 = vshrl.u32 %v1921, 7
        %v1923 = vsub.s32 %v1920, %v1922
        %v1924 = vrot.slane %v1916, %v1923
        %v1926 = vunpack.c.l.s4 1934713408
        %v1927 = vunpack.c.0.s8 %v1926
        %v1928 = vlaneseq
        %v1929 = vshrl.u32 %v1928, 7
        %v1930 = vsub.s32 %v1927, %v1929
        %v1931 = vrot.slane %v1917, %v1930
        %v1932 = vcombine.low %v1899, %v1915
        %v1933 = vcombine.high %v1899, %v1915
        %v1935 = vunpack.c.l.s4 1934713408
        %v1936 = vunpack.c.0.s8 %v1935
        %v1937 = vlaneseq
        %v1938 = vshrl.u32 %v1937, 7
        %v1939 = vsub.s32 %v1936, %v1938
        %v1940 = vrot.slane %v1932, %v1939
        %v1942 = vunpack.c.l.s4 1934713408
        %v1943 = vunpack.c.0.s8 %v1942
        %v1944 = vlaneseq
        %v1945 = vshrl.u32 %v1944, 7
        %v1946 = vsub.s32 %v1943, %v1945
        %v1947 = vrot.slane %v1933, %v1946
        %v1948 = vcombine.high %v1924, 0.0
        %v1949 = vcombine.high %v1931, 0.0
        %v1950 = vcombine.high %v1940, 0.0
        %v1951 = vcombine.high %v1947, 0.0
        %v1952 = vcombine.low %v1924, %v1931
        %v1954 = vunpack.c.l.s4 1983009808
        %v1955 = vunpack.c.0.s8 %v1954
        %v1956 = vlaneseq
        %v1957 = vshrl.u32 %v1956, 7
        %v1958 = vsub.s32 %v1955, %v1957
        %v1959 = vrot.slane %v1952, %v1958
        %v1960 = vcombine.low %v1948, %v1949
        %v1962 = vunpack.c.l.s4 1983009808
        %v1963 = vunpack.c.0.s8 %v1962
        %v1964 = vlaneseq
        %v1965 = vshrl.u32 %v1964, 7
        %v1966 = vsub.s32 %v1963, %v1965
        %v1967 = vrot.slane %v1960, %v1966
        %v1968 = vcombine.low %v1940, %v1947
        %v1970 = vunpack.c.l.s4 1983009808
        %v1971 = vunpack.c.0.s8 %v1970
        %v1972 = vlaneseq
        %v1973 = vshrl.u32 %v1972, 7
        %v1974 = vsub.s32 %v1971, %v1973
        %v1975 = vrot.slane %v1968, %v1974
        %v1976 = vcombine.low %v1950, %v1951
        %v1978 = vunpack.c.l.s4 1983009808
        %v1979 = vunpack.c.0.s8 %v1978
        %v1980 = vlaneseq
        %v1981 = vshrl.u32 %v1980, 7
        %v1982 = vsub.s32 %v1979, %v1981
        %v1983 = vrot.slane %v1976, %v1982
        %v1984 = vcombine.low %v1959, %v1967
        %v1985 = vcombine.high %v1959, %v1967
        %v1987 = vunpack.c.l.s4 1934713408
        %v1988 = vunpack.c.0.s8 %v1987
        %v1989 = vlaneseq
        %v1990 = vshrl.u32 %v1989, 7
        %v1991 = vsub.s32 %v1988, %v1990
        %v1992 = vrot.slane %v1984, %v1991
        %v1994 = vunpack.c.l.s4 1934713408
        %v1995 = vunpack.c.0.s8 %v1994
        %v1996 = vlaneseq
        %v1997 = vshrl.u32 %v1996, 7
        %v1998 = vsub.s32 %v1995, %v1997
        %v1999 = vrot.slane %v1985, %v1998
        %v2000 = vcombine.low %v1975, %v1983
        %v2001 = vcombine.high %v1975, %v1983
        %v2003 = vunpack.c.l.s4 1934713408
        %v2004 = vunpack.c.0.s8 %v2003
        %v2005 = vlaneseq
        %v2006 = vshrl.u32 %v2005, 7
        %v2007 = vsub.s32 %v2004, %v2006
        %v2008 = vrot.slane %v2000, %v2007
        %v2010 = vunpack.c.l.s4 1934713408
        %v2011 = vunpack.c.0.s8 %v2010
        %v2012 = vlaneseq
        %v2013 = vshrl.u32 %v2012, 7
        %v2014 = vsub.s32 %v2011, %v2013
        %v2015 = vrot.slane %v2001, %v2014
        %v2016 = vcombine.low %v1992, %v2008
        %v2017 = vcombine.high %v1992, %v2008
        %v2018 = vcombine.low %v1999, %v2015
        %v2019 = vcombine.high %v1999, %v2015
        %2021 = vrot.lane.b32.xlu0 %v2017, 8
        %v2022 = vpop.permute.xlu0 %2021
        %2025 = vrot.lane.b32.xlu0 %v2018, 16
        %v2026 = vpop.permute.xlu0 %2025
        %2029 = vrot.lane.b32.xlu0 %v2019, 24
        %v2030 = vpop.permute.xlu0 %2029
        %v2032 = vsel %vm1235, %v2016, %v2022
        %vm2033 = vcmask 130048
        %v2034 = vsel %vm2033, %v2032, %v2026
        %vm2035 = vcmask 195584
        %v2036 = vsel %vm2035, %v2034, %v2030
        %v2037 = vld [vmem:[%s640] sm:$0xff]
        %v2038 = vld [vmem:[%s640 + $0x8] sm:$0xff]
        %v2039 = vld [vmem:[%s640 + $0x10] sm:$0xff]
        %v2040 = vld [vmem:[%s640 + $0x18] sm:$0xff]
        %v2041 = vld [vmem:[%s643] sm:$0x1]
        %v2043 = vlaneseq
        %v2044 = vshrl.u32 %v2043, 7
        %v2045 = vsub.s32 0, %v2044
        %v2046 = vrot.slane %v2041, %v2045
        %v2049 = vsel %vm687, %v2036, 0
        %2051 = vmatprep.subr.mxu0 0.0
        %2052 = vmatpush1.msra.mxu0 %v2037
        %2053 = vmatprep.subr.mxu0 0.0
        %2054 = vmatpush1.msra.mxu0 %v2038
        %2055 = vmatprep.subr.mxu0 0.0
        %2056 = vmatpush1.msra.mxu0 %v2039
        %2057 = vmatprep.subr.mxu0 0.0
        %2058 = vmatpush1.msra.mxu0 %v2040
        %2059 = vmatprep.subr.mxu0 0.0
        %2060 = vmatpush1.msra.mxu0 0.0
        %2061 = vmatprep.subr.mxu0 0.0
        %2062 = vmatpush1.msra.mxu0 0.0
        %2063 = vmatprep.subr.mxu0 0.0
        %2064 = vmatpush1.msra.mxu0 0.0
        %2065 = vmatprep.subr.mxu0 0.0
        %2066 = vmatpush1.msra.mxu0 0.0
        %2067 = vmatprep.subr.mxu0 0.0
        %2068 = vmatpush1.msra.mxu0 0.0
        %2069 = vmatprep.subr.mxu0 0.0
        %2070 = vmatpush1.msra.mxu0 0.0
        %2071 = vmatprep.subr.mxu0 0.0
        %2072 = vmatpush1.msra.mxu0 0.0
        %2073 = vmatprep.subr.mxu0 0.0
        %2074 = vmatpush1.msra.mxu0 0.0
        %2075 = vmatprep.subr.mxu0 0.0
        %2076 = vmatpush1.msra.mxu0 0.0
        %2077 = vmatprep.subr.mxu0 0.0
        %2078 = vmatpush1.msra.mxu0 0.0
        %2079 = vmatprep.subr.mxu0 0.0
        %2080 = vmatpush1.msra.mxu0 0.0
        %2081 = vmatprep.subr.mxu0 0.0
        %2082 = vmatpush1.msra.mxu0 0.0
        %2083 = vmatprep.subr.mxu0 0.0
        %2084 = vmatpush1.msra.mxu0 0.0
        %2085 = vmatprep.subr.mxu0 0.0
        %2086 = vmatpush1.msra.mxu0 0.0
        %2087 = vmatprep.subr.mxu0 0.0
        %2088 = vmatpush1.msra.mxu0 0.0
        %2089 = vmatprep.subr.mxu0 0.0
        %2090 = vmatpush1.msra.mxu0 0.0
        %2091 = vmatprep.subr.mxu0 0.0
        %2092 = vmatpush1.msra.mxu0 0.0
        %2093 = vmatprep.subr.mxu0 0.0
        %2094 = vmatpush1.msra.mxu0 0.0
        %2095 = vmatprep.subr.mxu0 0.0
        %2096 = vmatpush1.msra.mxu0 0.0
        %2097 = vmatprep.subr.mxu0 0.0
        %2098 = vmatpush1.msra.mxu0 0.0
        %2099 = vmatprep.subr.mxu0 0.0
        %2100 = vmatpush1.msra.mxu0 0.0
        %2101 = vmatprep.subr.mxu0 0.0
        %2102 = vmatpush1.msra.mxu0 0.0
        %2103 = vmatprep.subr.mxu0 0.0
        %2104 = vmatpush1.msra.mxu0 0.0
        %2105 = vmatprep.subr.mxu0 0.0
        %2106 = vmatpush1.msra.mxu0 0.0
        %2107 = vmatprep.subr.mxu0 0.0
        %2108 = vmatpush1.msra.mxu0 0.0
        %2109 = vmatprep.subr.mxu0 0.0
        %2110 = vmatpush1.msra.mxu0 0.0
        %2111 = vmatprep.subr.mxu0 0.0
        %2112 = vmatpush1.msra.mxu0 0.0
        %2113 = vmatprep.subr.mxu0 0.0
        %2114 = vmatpush1.msra.mxu0 0.0
        %2115 = vmatprep.mubr.f32.mxu0 0.0
        %2116 = vmatmul.mubr.f32.gmra.mrb[0].mxu0 %v2049
        %v2117 = vpop.f32.mrb[0].mxu0
        %v2118 = vadd.f32 %v2046, %v2117
        %v2119 = vpop.f32.mrb[0].mxu0
        %2120 = vdwg.mxu0
        %v2121 = vadd.f32 %v684, %v2118
        %v2122 = vld [vmem:[%s646] sm:$0x1]
        %v2123 = vld [vmem:[%s649] sm:$0x1]
        %v2124 = vsel %vm687, %v2121, 0.0
        %2125 = vadd.xlane.f32.xlu0 %v2124
        %v2126 = vpop.xlane.xlu0 %2125
        %v2127 = vmul.f32 %v2126, %v691
        %v2128 = vsub.f32 %v2121, %v2127
        %v2129 = vmul.f32 %v2128, %v2128
        %v2130 = vsel %vm687, %v2129, 0.0
        %2131 = vadd.xlane.f32.xlu0 %v2130
        %v2132 = vpop.xlane.xlu0 %2131
        %v2133 = vmul.f32 %v2132, %v691
        %v2134 = vadd.f32 %v2133, 1e-05
        %v2135 = vrsqrt.pop %v2134
        %v2136 = vmul.f32 %v2128, %v2135
        %v2138 = vlaneseq
        %v2139 = vshrl.u32 %v2138, 7
        %v2140 = vsub.s32 0, %v2139
        %v2141 = vrot.slane %v2122, %v2140
        %v2143 = vmul.f32 %v2136, %v2141
        %v2145 = vlaneseq
        %v2146 = vshrl.u32 %v2145, 7
        %v2147 = vsub.s32 0, %v2146
        %v2148 = vrot.slane %v2123, %v2147
        %v2150 = vadd.f32 %v2143, %v2148
        %v2151 = vld [vmem:[%s654] sm:$0xff]
        %v2152 = vld [vmem:[%s654 + $0x8] sm:$0xff]
        %v2153 = vld [vmem:[%s654 + $0x10] sm:$0xff]
        %v2154 = vld [vmem:[%s654 + $0x18] sm:$0xff]
        %v2155 = vld [vmem:[%s657] sm:$0x1]
        %v2157 = vlaneseq
        %v2158 = vshrl.u32 %v2157, 7
        %v2159 = vsub.s32 0, %v2158
        %v2160 = vrot.slane %v2155, %v2159
        %v2163 = vsel %vm687, %v2150, 0
        %2165 = vmatprep.subr.mxu0 0.0
        %2166 = vmatpush1.msra.mxu0 %v2151
        %2167 = vmatprep.subr.mxu0 0.0
        %2168 = vmatpush1.msra.mxu0 %v2152
        %2169 = vmatprep.subr.mxu0 0.0
        %2170 = vmatpush1.msra.mxu0 %v2153
        %2171 = vmatprep.subr.mxu0 0.0
        %2172 = vmatpush1.msra.mxu0 %v2154
        %2173 = vmatprep.subr.mxu0 0.0
        %2174 = vmatpush1.msra.mxu0 0.0
        %2175 = vmatprep.subr.mxu0 0.0
        %2176 = vmatpush1.msra.mxu0 0.0
        %2177 = vmatprep.subr.mxu0 0.0
        %2178 = vmatpush1.msra.mxu0 0.0
        %2179 = vmatprep.subr.mxu0 0.0
        %2180 = vmatpush1.msra.mxu0 0.0
        %2181 = vmatprep.subr.mxu0 0.0
        %2182 = vmatpush1.msra.mxu0 0.0
        %2183 = vmatprep.subr.mxu0 0.0
        %2184 = vmatpush1.msra.mxu0 0.0
        %2185 = vmatprep.subr.mxu0 0.0
        %2186 = vmatpush1.msra.mxu0 0.0
        %2187 = vmatprep.subr.mxu0 0.0
        %2188 = vmatpush1.msra.mxu0 0.0
        %2189 = vmatprep.subr.mxu0 0.0
        %2190 = vmatpush1.msra.mxu0 0.0
        %2191 = vmatprep.subr.mxu0 0.0
        %2192 = vmatpush1.msra.mxu0 0.0
        %2193 = vmatprep.subr.mxu0 0.0
        %2194 = vmatpush1.msra.mxu0 0.0
        %2195 = vmatprep.subr.mxu0 0.0
        %2196 = vmatpush1.msra.mxu0 0.0
        %2197 = vmatprep.subr.mxu0 0.0
        %2198 = vmatpush1.msra.mxu0 0.0
        %2199 = vmatprep.subr.mxu0 0.0
        %2200 = vmatpush1.msra.mxu0 0.0
        %2201 = vmatprep.subr.mxu0 0.0
        %2202 = vmatpush1.msra.mxu0 0.0
        %2203 = vmatprep.subr.mxu0 0.0
        %2204 = vmatpush1.msra.mxu0 0.0
        %2205 = vmatprep.subr.mxu0 0.0
        %2206 = vmatpush1.msra.mxu0 0.0
        %2207 = vmatprep.subr.mxu0 0.0
        %2208 = vmatpush1.msra.mxu0 0.0
        %2209 = vmatprep.subr.mxu0 0.0
        %2210 = vmatpush1.msra.mxu0 0.0
        %2211 = vmatprep.subr.mxu0 0.0
        %2212 = vmatpush1.msra.mxu0 0.0
        %2213 = vmatprep.subr.mxu0 0.0
        %2214 = vmatpush1.msra.mxu0 0.0
        %2215 = vmatprep.subr.mxu0 0.0
        %2216 = vmatpush1.msra.mxu0 0.0
        %2217 = vmatprep.subr.mxu0 0.0
        %2218 = vmatpush1.msra.mxu0 0.0
        %2219 = vmatprep.subr.mxu0 0.0
        %2220 = vmatpush1.msra.mxu0 0.0
        %2221 = vmatprep.subr.mxu0 0.0
        %2222 = vmatpush1.msra.mxu0 0.0
        %2223 = vmatprep.subr.mxu0 0.0
        %2224 = vmatpush1.msra.mxu0 0.0
        %2225 = vmatprep.subr.mxu0 0.0
        %2226 = vmatpush1.msra.mxu0 0.0
        %2227 = vmatprep.subr.mxu0 0.0
        %2228 = vmatpush1.msra.mxu0 0.0
        %2229 = vmatprep.mubr.f32.mxu0 0.0
        %2230 = vmatmul.mubr.f32.gmra.mrb[0].mxu0 %v2163
        %v2231 = vpop.f32.mrb[0].mxu0
        %v2232 = vadd.f32 %v2160, %v2231
        %v2233 = vpop.f32.mrb[0].mxu0
        %2234 = vdwg.mxu0
        %v2235 = vmax.f32 %v2232, 0.0
        %v2236 = vld [vmem:[%s662] sm:$0xff]
        %v2237 = vld [vmem:[%s662 + $0x8] sm:$0xff]
        %v2238 = vld [vmem:[%s662 + $0x10] sm:$0xff]
        %v2239 = vld [vmem:[%s662 + $0x18] sm:$0xff]
        %v2240 = vld [vmem:[%s662 + $0x20] sm:$0xff]
        %v2241 = vld [vmem:[%s662 + $0x28] sm:$0xff]
        %v2242 = vld [vmem:[%s662 + $0x30] sm:$0xff]
        %v2243 = vld [vmem:[%s662 + $0x38] sm:$0xff]
        %v2244 = vld [vmem:[%s665] sm:$0x1]
        %v2246 = vlaneseq
        %v2247 = vshrl.u32 %v2246, 7
        %v2248 = vsub.s32 0, %v2247
        %v2249 = vrot.slane %v2244, %v2248
        %vm2251 = vcmask 523264
        %v2253 = vsel %vm2251, %v2235, 0
        %2255 = vmatprep.subr.mxu0 0.0
        %2256 = vmatpush1.msra.mxu0 %v2236
        %2257 = vmatprep.subr.mxu0 0.0
        %2258 = vmatpush1.msra.mxu0 %v2237
        %2259 = vmatprep.subr.mxu0 0.0
        %2260 = vmatpush1.msra.mxu0 %v2238
        %2261 = vmatprep.subr.mxu0 0.0
        %2262 = vmatpush1.msra.mxu0 %v2239
        %2263 = vmatprep.subr.mxu0 0.0
        %2264 = vmatpush1.msra.mxu0 %v2240
        %2265 = vmatprep.subr.mxu0 0.0
        %2266 = vmatpush1.msra.mxu0 %v2241
        %2267 = vmatprep.subr.mxu0 0.0
        %2268 = vmatpush1.msra.mxu0 %v2242
        %2269 = vmatprep.subr.mxu0 0.0
        %2270 = vmatpush1.msra.mxu0 %v2243
        %2271 = vmatprep.subr.mxu0 0.0
        %2272 = vmatpush1.msra.mxu0 0.0
        %2273 = vmatprep.subr.mxu0 0.0
        %2274 = vmatpush1.msra.mxu0 0.0
        %2275 = vmatprep.subr.mxu0 0.0
        %2276 = vmatpush1.msra.mxu0 0.0
        %2277 = vmatprep.subr.mxu0 0.0
        %2278 = vmatpush1.msra.mxu0 0.0
        %2279 = vmatprep.subr.mxu0 0.0
        %2280 = vmatpush1.msra.mxu0 0.0
        %2281 = vmatprep.subr.mxu0 0.0
        %2282 = vmatpush1.msra.mxu0 0.0
        %2283 = vmatprep.subr.mxu0 0.0
        %2284 = vmatpush1.msra.mxu0 0.0
        %2285 = vmatprep.subr.mxu0 0.0
        %2286 = vmatpush1.msra.mxu0 0.0
        %2287 = vmatprep.subr.mxu0 0.0
        %2288 = vmatpush1.msra.mxu0 0.0
        %2289 = vmatprep.subr.mxu0 0.0
        %2290 = vmatpush1.msra.mxu0 0.0
        %2291 = vmatprep.subr.mxu0 0.0
        %2292 = vmatpush1.msra.mxu0 0.0
        %2293 = vmatprep.subr.mxu0 0.0
        %2294 = vmatpush1.msra.mxu0 0.0
        %2295 = vmatprep.subr.mxu0 0.0
        %2296 = vmatpush1.msra.mxu0 0.0
        %2297 = vmatprep.subr.mxu0 0.0
        %2298 = vmatpush1.msra.mxu0 0.0
        %2299 = vmatprep.subr.mxu0 0.0
        %2300 = vmatpush1.msra.mxu0 0.0
        %2301 = vmatprep.subr.mxu0 0.0
        %2302 = vmatpush1.msra.mxu0 0.0
        %2303 = vmatprep.subr.mxu0 0.0
        %2304 = vmatpush1.msra.mxu0 0.0
        %2305 = vmatprep.subr.mxu0 0.0
        %2306 = vmatpush1.msra.mxu0 0.0
        %2307 = vmatprep.subr.mxu0 0.0
        %2308 = vmatpush1.msra.mxu0 0.0
        %2309 = vmatprep.subr.mxu0 0.0
        %2310 = vmatpush1.msra.mxu0 0.0
        %2311 = vmatprep.subr.mxu0 0.0
        %2312 = vmatpush1.msra.mxu0 0.0
        %2313 = vmatprep.subr.mxu0 0.0
        %2314 = vmatpush1.msra.mxu0 0.0
        %2315 = vmatprep.subr.mxu0 0.0
        %2316 = vmatpush1.msra.mxu0 0.0
        %2317 = vmatprep.subr.mxu0 0.0
        %2318 = vmatpush1.msra.mxu0 0.0
        %2319 = vmatprep.mubr.f32.mxu0 0.0
        %2320 = vmatmul.mubr.f32.gmra.mrb[0].mxu0 %v2253
        %v2321 = vpop.f32.mrb[0].mxu0
        %v2322 = vadd.f32 %v2249, %v2321
        %v2323 = vpop.f32.mrb[0].mxu0
        %2324 = vdwg.mxu0
        %v2325 = vadd.f32 %v2121, %v2322
        %2326 = vst.msk [vmem:[#allocation2] sm:$0xff] %vm687, %v2325
        %p2327 = scmp.eq.s32.totalorder %s34, 1
        // Predicated region
        $region77: #{encoder_forward.1} parent=71 // pred_check
          %p2328 = pneg %p2327
        $region78: #{encoder_forward.1} parent=71 // pred_check_branch
          %2330 = sbr.rel (%p2328) target = $region80
        $region79: #{encoder_forward.1} parent=71 // pred_region
          %v2331 = vsel %vm687, %v2325, 0.0
          %v2332 = vrot.slane %v2331, 4
          %v2333 = vadd.f32 %v2331, %v2332
          %v2334 = vrot.slane %v2333, 2
          %v2335 = vadd.f32 %v2333, %v2334
          %v2336 = vrot.slane %v2335, 1
          %v2337 = vadd.f32 %v2335, %v2336
          %v2338 = vrcp.pop 8.0
          %v2339 = vmul.f32 %v2337, %v2338
          %vm2340 = vcmask 253952
          %2341 = vst.msk [vmem:[%s609] sm:$0x1] %vm2340, %v2339
        $region80: #{encoder_forward.1} parent=71 // pred_fallthru
          _
        %s2342 = sand.u32 %s382, 1
        %s2343 = scalar_lea.sflag [#allocation4], %s2342
        %s2344 = sand.u32 %s382, 1
        %s2345 = scalar_lea.vmem [#allocation3], %s2344
        %p2346 = scmp.lt.s32.totalorder %s34, 1
        %s2347 = scalar_select %p2346, %s34, 1
        %p2348 = scmp.lt.s32.totalorder %s33, 1
        %s2349 = scalar_select %p2348, %s33, 1
        %s2350 = smul.addr %s2349, 4
        %s2351 = smul.addr %s2347, 8
        %s2352 = sadd.s32 %s2350, %s2351
        %s2353 = smul.addr %s2352, 8
        %s2354 = scalar_lea.vmem %s14, %s2353
        // Predicated region
        $region81: #{encoder_forward.1} parent=71 // pred_check
          %p2355 = pneg %p392
        $region82: #{encoder_forward.1} parent=71 // pred_check_branch
          %2357 = sbr.rel (%p2355) target = $region84
        $region83: #{encoder_forward.1} parent=71 // pred_region
          %s2359 = ssub.s32 16, 16
          %2360 = vsyncadd %s2343, %s2359
          %s2361 = smul.addr %s33, 16
          %s2362 = scalar_lea.hbm %s13, %s2361
          %s2364 = sshll.u32 %s2345, 4
          %s2365 = int_to_ptr.vmem [resolvable:$true] %s2364
          %2367 = dma.vmem_to_hbm [thread:$0]  %s2365, 16, %s2362, %s2343
        $region84: #{encoder_forward.1} parent=71 // pred_fallthru
          _
        // Predicated region
        $region85: #{encoder_forward.1} parent=71 // pred_check
          %p2368 = pneg %p420
        $region86: #{encoder_forward.1} parent=71 // pred_check_branch
          %2370 = sbr.rel (%p2368) target = $region88
        $region87: #{encoder_forward.1} parent=71 // pred_region
          _
        $region88: #{encoder_forward.1} parent=71 // pred_fallthru
          _
      $region72: #{encoder_forward.1} parent=5 // pred_fallthru
        _
      %p2371 = scmp.le.s32.totalorder 2, %s24
      // Predicated region
      $region89: #{encoder_forward.1} parent=5 // pred_check
        %p2372 = pneg %p2371
      $region90: #{encoder_forward.1} parent=5 // pred_check_branch
        %2374 = sbr.rel (%p2372) target = $region92
      $region91: #{encoder_forward.1} parent=5 // pred_region
        %s2375 = ssub.s32 %s24, 2
        // Predicated region
        $region93: #{encoder_forward.1} parent=91 // pred_check
          %p2376 = pneg %p398
        $region94: #{encoder_forward.1} parent=91 // pred_check_branch
          %2378 = sbr.rel (%p2376) target = $region96
        $region95: #{encoder_forward.1} parent=91 // pred_region
          %s2379 = sand.u32 %s383, 1
          %s2380 = scalar_lea.sflag [#allocation4], %s2379
          %s2381 = sand.u32 %s383, 1
          %s2382 = scalar_lea.vmem [#allocation3], %s2381
          %2383 = dma.done %s2380, 16
        $region96: #{encoder_forward.1} parent=91 // pred_fallthru
          _
        // Predicated region
        $region97: #{encoder_forward.1} parent=91 // pred_check
          %p2384 = pneg %p426
        $region98: #{encoder_forward.1} parent=91 // pred_check_branch
          %2386 = sbr.rel (%p2384) target = $region100
        $region99: #{encoder_forward.1} parent=91 // pred_region
          %p2387 = scmp.lt.s32.totalorder %s36, 1
          %s2388 = scalar_select %p2387, %s36, 1
          %p2389 = scmp.lt.s32.totalorder %s35, 1
          %s2390 = scalar_select %p2389, %s35, 1
          %s2391 = smul.addr %s2390, 4
          %s2392 = smul.addr %s2388, 8
          %s2393 = sadd.s32 %s2391, %s2392
          %s2394 = smul.addr %s2393, 8
          %s2395 = scalar_lea.vmem %s14, %s2394
        $region100: #{encoder_forward.1} parent=91 // pred_fallthru
          _
      $region92: #{encoder_forward.1} parent=5 // pred_fallthru
        _
    $region6: #{encoder_forward.1} parent=1 // loop_footer
      %s28 = sadd.s32 1, %s24
    $region7: #{encoder_forward.1} parent=1 // loop_footer_branch
      %23 = sbr.rel target = $region3
    $region8: #{encoder_forward.1} parent=1 // loop_exit
      _
    %2396 = vsyncpa [#allocation4], 1
    %s2397 = scalar_lea.sflag [#allocation4], 1
    %2398 = vsyncpa %s2397, 1

</llo_original>
